<compile_context>
chip_gen: v5e
topology: v5e:2x2
jax: 0.10.0
libtpu: 0.0.40
codegen_flags: <defaults>
</compile_context>

<pallas_src>
import math
from functools import partial

import jax
import jax.numpy as jnp
from jax.experimental import pallas as pl
from jax.experimental.pallas import tpu as pltpu

_VMEM_LIMIT = 32 * 1024 * 1024
_NEG_INF = -1e30
_LN_EPS = 1e-5


def _round_up(x, m):
    return ((x + m - 1) // m) * m


def _pad_rows(x, mp):
    m = x.shape[0]
    if mp == m:
        return x
    return jnp.pad(x, ((0, mp - m),) + ((0, 0),) * (x.ndim - 1))


def _row_tiling(M, max_tm=256):
    """Pick the largest row tile (<= max_tm) and the padded row count."""
    tm = min(max_tm, _round_up(M, 8))
    mp = _round_up(M, tm)
    return tm, mp


def _layernorm(y, g, b):
    mu = jnp.mean(y, axis=-1, keepdims=True)
    var = jnp.mean((y - mu) ** 2, axis=-1, keepdims=True)
    return (y - mu) * jax.lax.rsqrt(var + _LN_EPS) * g + b


# ----------------------------------------------------------------------------
# Fused attention block kernel: QKV proj + MHA + out proj + residual + LN
# ----------------------------------------------------------------------------
def _attn_block_kernel(x_ref, m_ref, wq_ref, wk_ref, wv_ref, bq_ref, bk_ref,
                       bv_ref, wo_ref, bo_ref, g_ref, bt_ref, o_ref,
                       *, n_heads, scale):
    x = x_ref[0]                                   # [L, D] bf16
    m = m_ref[0]                                   # [1, L] f32 key mask
    # residual + output-projection bias accumulator (f32)
    y = bo_ref[...] + x.astype(jnp.float32)        # [L, D]
    # Unrolled per-head loop: only 2-D dots, weights indexed on leading dim.
    for h in range(n_heads):
        q = jnp.dot(x, wq_ref[h], preferred_element_type=jnp.float32) + bq_ref[h]
        k = jnp.dot(x, wk_ref[h], preferred_element_type=jnp.float32) + bk_ref[h]
        v = jnp.dot(x, wv_ref[h], preferred_element_type=jnp.float32) + bv_ref[h]
        # scores = q . k^T  (contraction on last dims, no explicit transpose)
        s = jax.lax.dot_general(q.astype(jnp.bfloat16), k.astype(jnp.bfloat16),
                                (((1,), (1,)), ((), ())),
                                preferred_element_type=jnp.float32) * scale
        s = jnp.where(m > 0.0, s, _NEG_INF)        # mask keys (broadcast [1,L])
        s = s - jnp.max(s, axis=-1, keepdims=True)
        p = jnp.exp(s)
        p = p * pl.reciprocal(jnp.sum(p, axis=-1, keepdims=True), approx=True)
        ctx = jnp.dot(p.astype(jnp.bfloat16), v.astype(jnp.bfloat16),
                      preferred_element_type=jnp.float32)          # [L, dh]
        y = y + jnp.dot(ctx.astype(jnp.bfloat16), wo_ref[h],
                        preferred_element_type=jnp.float32)        # [L, D]
    out = _layernorm(y, g_ref[...], bt_ref[...])
    o_ref[0] = out.astype(o_ref.dtype)


def attention_block(x, mask, p, n_heads):
    """x:[B,L,D] -> LayerNorm(x + MHA(x)) : [B,L,D] bf16. One launch, grid=(B,)."""
    B, L, D = x.shape
    dh = D // n_heads
    scale = 1.0 / math.sqrt(dh)
    m3 = mask.reshape(B, 1, L).astype(jnp.float32)
    wspec3 = lambda shape: pl.BlockSpec(shape, lambda b: (0, 0, 0))
    return pl.pallas_call(
        partial(_attn_block_kernel, n_heads=n_heads, scale=scale),
        out_shape=jax.ShapeDtypeStruct((B, L, D), jnp.bfloat16),
        grid=(B,),
        in_specs=[
            pl.BlockSpec((1, L, D), lambda b: (b, 0, 0)),          # x
            pl.BlockSpec((1, 1, L), lambda b: (b, 0, 0)),          # key mask
            wspec3((n_heads, D, dh)),                              # wq
            wspec3((n_heads, D, dh)),                              # wk
            wspec3((n_heads, D, dh)),                              # wv
            wspec3((n_heads, 1, dh)),                              # bq
            wspec3((n_heads, 1, dh)),                              # bk
            wspec3((n_heads, 1, dh)),                              # bv
            wspec3((n_heads, dh, D)),                              # wo (per-head)
            pl.BlockSpec((1, D), lambda b: (0, 0)),                # bo
            pl.BlockSpec((1, D), lambda b: (0, 0)),                # ln gamma
            pl.BlockSpec((1, D), lambda b: (0, 0)),                # ln beta
        ],
        out_specs=pl.BlockSpec((1, L, D), lambda b: (b, 0, 0)),
        compiler_params=pltpu.CompilerParams(
            dimension_semantics=("parallel",),
            vmem_limit_bytes=_VMEM_LIMIT),
    )(x.astype(jnp.bfloat16), m3,
      p['wq'].astype(jnp.bfloat16), p['wk'].astype(jnp.bfloat16),
      p['wv'].astype(jnp.bfloat16),
      p['bq'].astype(jnp.float32), p['bk'].astype(jnp.float32),
      p['bv'].astype(jnp.float32),
      p['wo'].astype(jnp.bfloat16), p['bo'].reshape(1, D).astype(jnp.float32),
      p['ln1_g'].reshape(1, D).astype(jnp.float32),
      p['ln1_b'].reshape(1, D).astype(jnp.float32))


# ----------------------------------------------------------------------------
# Fused FFN kernel: relu(x@w1+b1)@w2 + b2 + residual -> LN -> row mask
# ----------------------------------------------------------------------------
def _ffn_res_ln_kernel(x_ref, w1_ref, b1_ref, w2_ref, b2_ref, g_ref, bt_ref,
                       m_ref, o_ref, *, apply_mask):
    x = x_ref[...]                                                   # [tm, D] bf16
    h = jnp.dot(x, w1_ref[...], preferred_element_type=jnp.float32) + b1_ref[...]
    h = jnp.maximum(h, 0.0)                                          # relu, f32
    y = jnp.dot(h.astype(jnp.bfloat16), w2_ref[...],
                preferred_element_type=jnp.float32)
    y = y + b2_ref[...] + x.astype(jnp.float32)                      # bias + residual
    out = _layernorm(y, g_ref[...], bt_ref[...])
    if apply_mask:
        out = out * m_ref[...]
    o_ref[...] = out.astype(o_ref.dtype)


def ffn_res_layernorm(x, w1, b1, w2, b2, gamma, beta, mask_rows=None, max_tm=256):
    """LayerNorm(relu(x@w1+b1)@w2 + b2 + x) [* mask]; x:[M,D] -> [M,D] bf16."""
    M, D = x.shape
    F = w1.shape[1]
    tm, mp = _row_tiling(M, max_tm)
    xp = _pad_rows(x, mp).astype(jnp.bfloat16)
    apply_mask = mask_rows is not None
    if mask_rows is None:
        mask_rows = jnp.ones((M,), jnp.float32)
    mk = _pad_rows(mask_rows.reshape(M, 1).astype(jnp.float32), mp)
    out = pl.pallas_call(
        partial(_ffn_res_ln_kernel, apply_mask=apply_mask),
        out_shape=jax.ShapeDtypeStruct((mp, D), jnp.bfloat16),
        grid=(mp // tm,),
        in_specs=[
            pl.BlockSpec((tm, D), lambda i: (i, 0)),
            pl.BlockSpec((D, F), lambda i: (0, 0)),
            pl.BlockSpec((1, F), lambda i: (0, 0)),
            pl.BlockSpec((F, D), lambda i: (0, 0)),
            pl.BlockSpec((1, D), lambda i: (0, 0)),
            pl.BlockSpec((1, D), lambda i: (0, 0)),
            pl.BlockSpec((1, D), lambda i: (0, 0)),
            pl.BlockSpec((tm, 1), lambda i: (i, 0)),
        ],
        out_specs=pl.BlockSpec((tm, D), lambda i: (i, 0)),
        compiler_params=pltpu.CompilerParams(
            dimension_semantics=("parallel",),
            vmem_limit_bytes=_VMEM_LIMIT),
    )(xp, w1.astype(jnp.bfloat16), b1.reshape(1, F).astype(jnp.float32),
      w2.astype(jnp.bfloat16), b2.reshape(1, D).astype(jnp.float32),
      gamma.reshape(1, D).astype(jnp.float32),
      beta.reshape(1, D).astype(jnp.float32), mk)
    return out[:M]


# ----------------------------------------------------------------------------
# Masked mean reduction and par-attention scoring
# ----------------------------------------------------------------------------
def _masked_mean_kernel(x_ref, m_ref, o_ref):
    x = x_ref[...].astype(jnp.float32)                      # [B, L, D]
    m = m_ref[...]                                          # [B, L, 1] f32
    s = jnp.sum(x * m, axis=1)                              # [B, D]
    cnt = jnp.maximum(jnp.sum(m, axis=1), 1.0)              # guard all-pad rows
    o_ref[...] = s / cnt


def masked_mean(x, mask):
    """sum(x*mask)/max(sum(mask),1) over seq axis. x:[B,L,D] -> [B,D] f32."""
    B, L, D = x.shape
    m3 = mask.reshape(B, L, 1).astype(jnp.float32)
    return pl.pallas_call(
        _masked_mean_kernel,
        out_shape=jax.ShapeDtypeStruct((B, D), jnp.float32),
        grid=(1,),
        in_specs=[
            pl.BlockSpec((B, L, D), lambda i: (0, 0, 0)),
            pl.BlockSpec((B, L, 1), lambda i: (0, 0, 0)),
        ],
        out_specs=pl.BlockSpec((B, D), lambda i: (0, 0)),
        compiler_params=pltpu.CompilerParams(vmem_limit_bytes=_VMEM_LIMIT),
    )(x, m3)


def _score_kernel(cand_ref, ctxt_ref, m_ref, o_ref, *, scale):
    cand = cand_ref[...]                                    # [B, C, D] bf16
    ctxt = ctxt_ref[...]                                    # [B, S, D] bf16
    m = m_ref[...]                                          # [B, 1, S] f32
    raw = jnp.einsum('bcd,bsd->bcs', cand, ctxt,
                     preferred_element_type=jnp.float32)    # cand . ctxt
    l1 = jnp.where(m > 0.0, raw * scale, _NEG_INF)          # masked_fill(mask==0)
    l1 = l1 - jnp.max(l1, axis=-1, keepdims=True)
    p = jnp.exp(l1)
    p = p * pl.reciprocal(jnp.sum(p, axis=-1, keepdims=True), approx=True)
    # scores = sum_d((p @ ctxt) * cand) == sum_s p * (cand . ctxt): one matmul saved.
    o_ref[...] = jnp.sum(p * raw, axis=-1)                  # [B, C] lane-dense slab


@partial(jax.jit, static_argnames=("scale",))
def par_basic_attention_score(cand_embed, ctxt_rep, ctxt_rep_mask, *, scale):
    bsz, C, D = cand_embed.shape
    S = ctxt_rep.shape[1]
    m3 = ctxt_rep_mask.astype(jnp.float32).reshape(bsz, 1, S)
    return pl.pallas_call(
        partial(_score_kernel, scale=scale),
        out_shape=jax.ShapeDtypeStruct((bsz, C), jnp.float32),
        grid=(1,),
        in_specs=[
            pl.BlockSpec((bsz, C, D), lambda i: (0, 0, 0)),
            pl.BlockSpec((bsz, S, D), lambda i: (0, 0, 0)),
            pl.BlockSpec((bsz, 1, S), lambda i: (0, 0, 0)),
        ],
        out_specs=pl.BlockSpec((bsz, C), lambda i: (0, 0)),
        compiler_params=pltpu.CompilerParams(vmem_limit_bytes=_VMEM_LIMIT),
    )(cand_embed.astype(jnp.bfloat16), ctxt_rep.astype(jnp.bfloat16), m3)


# ----------------------------------------------------------------------------
# Transformer encoder (ParlAI-style, variant='aiayn', reduction_type='mean')
# ----------------------------------------------------------------------------
def init_encoder_params(key, vocab, D, n_layers, ffn, n_positions, null_idx, n_heads):
    dh = D // n_heads
    keys = jax.random.split(key, 2 + n_layers)
    emb = jax.random.normal(keys[0], (vocab, D), jnp.float32) * (D ** -0.5)
    emb = emb.at[null_idx].set(0.0)                 # padding_idx row is zero
    pos = jax.random.normal(keys[1], (n_positions, D), jnp.float32) * 0.02
    layers = []
    for li in range(n_layers):
        lk = jax.random.split(keys[2 + li], 6)
        dense = lambda k, shape, fan_in: jax.random.normal(k, shape, jnp.float32) * (fan_in ** -0.5)
        layers.append(dict(
            # per-head stacked projection weights (kernel indexes leading dim)
            wq=dense(lk[0], (n_heads, D, dh), D), bq=jnp.zeros((n_heads, 1, dh), jnp.float32),
            wk=dense(lk[1], (n_heads, D, dh), D), bk=jnp.zeros((n_heads, 1, dh), jnp.float32),
            wv=dense(lk[2], (n_heads, D, dh), D), bv=jnp.zeros((n_heads, 1, dh), jnp.float32),
            wo=dense(lk[3], (n_heads, dh, D), D), bo=jnp.zeros((D,), jnp.float32),
            w1=dense(lk[4], (D, ffn), D), b1=jnp.zeros((ffn,), jnp.float32),
            w2=dense(lk[5], (ffn, D), ffn), b2=jnp.zeros((D,), jnp.float32),
            ln1_g=jnp.ones((D,), jnp.float32), ln1_b=jnp.zeros((D,), jnp.float32),
            ln2_g=jnp.ones((D,), jnp.float32), ln2_b=jnp.zeros((D,), jnp.float32),
        ))
    return dict(emb=emb, pos=pos, layers=layers)


def transformer_layer(p, x, mask, n_heads):
    B, L, D = x.shape
    # attention block (QKV + MHA + out-proj + residual + LN) — one launch
    x1 = attention_block(x, mask, p, n_heads)
    # FFN block (relu MLP + residual + LN + row mask) — one launch
    x2 = ffn_res_layernorm(x1.reshape(B * L, D), p['w1'], p['b1'], p['w2'], p['b2'],
                           p['ln2_g'], p['ln2_b'], mask_rows=mask.reshape(B * L))
    return x2.reshape(B, L, D)


def transformer_encoder(params, tokens, null_idx, n_heads,
                        embeddings_scale=True, output_scaling=1.0):
    B, L = tokens.shape
    D = params['emb'].shape[1]
    mask = (tokens != null_idx).astype(jnp.float32)                  # [B, L]
    positions = jnp.maximum(jnp.cumsum(mask, axis=1).astype(jnp.int32) - 1, 0)
    x = params['emb'][tokens]                                        # glue: gather
    if embeddings_scale:
        x = x * math.sqrt(D)
    x = x + params['pos'][positions]
    # TODO(synk): n_segments=2 segment embeddings exist in __init__ but ParlAI passes
    # segments=None in this forward path, so they contribute nothing here.
    x = (x * mask[..., None]).astype(jnp.bfloat16)
    for lp in params['layers']:
        x = transformer_layer(lp, x, mask, n_heads)
    out = masked_mean(x, mask)                                       # 'mean' reduction
    return out * output_scaling


_encoder_jit = jax.jit(transformer_encoder, static_argnums=(2, 3, 4))


# ----------------------------------------------------------------------------
# ParEncoderModule
# ----------------------------------------------------------------------------
class ParEncoderModule:
    def __init__(self, opt, vocab_size, null_idx, key):
        self.null_idx = null_idx
        self.n_heads = opt['n_heads']
        self.embeddings_scale = opt['embeddings_scale']
        self.output_scaling = opt['output_scaling']
        self.parencoder_type = opt['parencoder_type']
        self.n_codes = opt['par_num']
        self.attention_type = opt['par_attention_type']     # 'basic' or 'sqrt'
        # TODO(synk): 'multihead' / 'cosine' par-attention variants not implemented;
        # only the ParBasicAttention dot-product path ('basic'/'sqrt') is supported.
        k1, k2 = jax.random.split(key)
        D, nl, ffn, npos = (opt['embedding_size'], opt['n_layers'],
                            opt['ffn_size'], opt['n_positions'])
        self.embedding_size = D
        self.params_ctxt = init_encoder_params(
            k1, vocab_size, D, nl, ffn, npos, null_idx, self.n_heads)
        self.params_cand = init_encoder_params(
            k2, vocab_size, D, nl, ffn, npos, null_idx, self.n_heads)

    # ---- encode() branch ----------------------------------------------------
    def encode(self, ctxt_tokens, cand_tokens):
        cand_embed = None
        ctxt_rep = None
        if cand_tokens is not None:
            assert cand_tokens.ndim == 3
            bsz, num_cands, L = cand_tokens.shape
            cand_embed = _encoder_jit(
                self.params_cand, cand_tokens.reshape(bsz * num_cands, L),
                self.null_idx, self.n_heads, self.embeddings_scale,
                self.output_scaling)
            cand_embed = cand_embed.reshape(bsz, num_cands, -1)
        if ctxt_tokens is not None:
            assert ctxt_tokens.ndim == 3
            bsz, num_segments, L = ctxt_tokens.shape
            ctxt_out = _encoder_jit(
                self.params_ctxt, ctxt_tokens.reshape(bsz * num_segments, L),
                self.null_idx, self.n_heads, self.embeddings_scale,
                self.output_scaling)
            ctxt_rep = ctxt_out.reshape(bsz, num_segments, -1)
        return ctxt_rep, cand_embed

    # ---- score() branch (ParBasicAttention + reduction, fused kernel) -------
    def score(self, ctxt_rep, ctxt_rep_mask, cand_embed):
        D = cand_embed.shape[-1]
        scale = 1.0 / math.sqrt(D) if self.attention_type == 'sqrt' else 1.0
        # Note: the ParBasicAttention n_codes==1 unsqueeze edge-case is handled
        # implicitly — the codes dimension is never dropped in this implementation.
        return par_basic_attention_score(cand_embed, ctxt_rep, ctxt_rep_mask,
                                         scale=scale)

    # ---- forward dispatch ----------------------------------------------------
    def __call__(self, ctxt_tokens=None, cand_tokens=None,
                 ctxt_rep=None, ctxt_rep_mask=None, cand_rep=None):
        if ctxt_tokens is not None or cand_tokens is not None:
            return self.encode(ctxt_tokens, cand_tokens)
        elif ctxt_rep is not None and ctxt_rep_mask is not None and cand_rep is not None:
            return self.score(ctxt_rep, ctxt_rep_mask, cand_rep)
        raise Exception('Unsupported operation')


# ----------------------------------------------------------------------------
# Driver
# ----------------------------------------------------------------------------
if __name__ == "__main__":
    key = jax.random.PRNGKey(0)
    opt = dict(
        embedding_size=32, n_heads=2, n_layers=2, ffn_size=64,
        dropout=0.0, attention_dropout=0.0, relu_dropout=0.0,
        learn_positional_embeddings=True, embeddings_scale=True,
        reduction_type='mean', n_positions=32, activation='relu',
        variant='aiayn', output_scaling=1.0,
        parencoder_type='n_segments', par_num=3,
        par_attention_type='basic', par_attention_num_heads=2,
    )
    vocab_size = 100
    null_idx = 0

    kp, kt1, kt2 = jax.random.split(key, 3)
    model = ParEncoderModule(opt, vocab_size, null_idx, kp)

    bsz, n_segs, num_cands, seq_len = 2, 3, 4, 8
    ctxt_tokens = jax.random.randint(kt1, (bsz, n_segs, seq_len), 1, vocab_size, dtype=jnp.int32)
    cand_tokens = jax.random.randint(kt2, (bsz, num_cands, seq_len), 1, vocab_size, dtype=jnp.int32)
    # add a little padding at the tails to exercise the masks
    ctxt_tokens = ctxt_tokens.at[:, :, -2:].set(null_idx)
    cand_tokens = cand_tokens.at[:, :, -1:].set(null_idx)

    # operation 1: encode
    ctxt_rep, cand_rep = model(ctxt_tokens=ctxt_tokens, cand_tokens=cand_tokens)
    # operation 2: score
    ctxt_rep_mask = jnp.ones((bsz, n_segs), dtype=jnp.bool_)
    scores = model(ctxt_rep=ctxt_rep, ctxt_rep_mask=ctxt_rep_mask, cand_rep=cand_rep)

    jax.block_until_ready((ctxt_rep, cand_rep, scores))
    assert ctxt_rep.shape == (bsz, n_segs, opt['embedding_size'])
    assert cand_rep.shape == (bsz, num_cands, opt['embedding_size'])
    assert scores.shape == (bsz, num_cands)
    assert bool(jnp.all(jnp.isfinite(ctxt_rep)) & jnp.all(jnp.isfinite(cand_rep))
                & jnp.all(jnp.isfinite(scores)))
    print("KERNEL_OK")
</pallas_src>

<mosaic_0001>
module attributes {stable_mosaic.version = 11 : i64} {
  func.func @_attn_block_kernel(%arg0: i32, %arg1: memref<1x8x32xbf16, #tpu.memory_space<vmem>>, %arg2: memref<1x1x8xf32, #tpu.memory_space<vmem>>, %arg3: memref<2x32x16xbf16, #tpu.memory_space<vmem>>, %arg4: memref<2x32x16xbf16, #tpu.memory_space<vmem>>, %arg5: memref<2x32x16xbf16, #tpu.memory_space<vmem>>, %arg6: memref<2x1x16xf32, #tpu.memory_space<vmem>>, %arg7: memref<2x1x16xf32, #tpu.memory_space<vmem>>, %arg8: memref<2x1x16xf32, #tpu.memory_space<vmem>>, %arg9: memref<2x16x32xbf16, #tpu.memory_space<vmem>>, %arg10: memref<1x32xf32, #tpu.memory_space<vmem>>, %arg11: memref<1x32xf32, #tpu.memory_space<vmem>>, %arg12: memref<1x32xf32, #tpu.memory_space<vmem>>, %arg13: memref<1x8x32xbf16, #tpu.memory_space<vmem>>) attributes {dimension_semantics = [#tpu.dimension_semantics<parallel>], iteration_bounds = array<i64: 8>, scalar_prefetch = 0 : i64, scratch_operands = 0 : i64, tpu.core_type = #tpu.core_type<tc>, window_params = [{transform_indices = @transform_0, window_bounds = array<i64: 1, 8, 32>}, {transform_indices = @transform_1, window_bounds = array<i64: 1, 1, 8>}, {pipeline_mode = #tpu.pipeline_mode<synchronous>, transform_indices = @transform_2, window_bounds = array<i64: 2, 32, 16>}, {pipeline_mode = #tpu.pipeline_mode<synchronous>, transform_indices = @transform_3, window_bounds = array<i64: 2, 32, 16>}, {pipeline_mode = #tpu.pipeline_mode<synchronous>, transform_indices = @transform_4, window_bounds = array<i64: 2, 32, 16>}, {pipeline_mode = #tpu.pipeline_mode<synchronous>, transform_indices = @transform_5, window_bounds = array<i64: 2, 1, 16>}, {pipeline_mode = #tpu.pipeline_mode<synchronous>, transform_indices = @transform_6, window_bounds = array<i64: 2, 1, 16>}, {pipeline_mode = #tpu.pipeline_mode<synchronous>, transform_indices = @transform_7, window_bounds = array<i64: 2, 1, 16>}, {pipeline_mode = #tpu.pipeline_mode<synchronous>, transform_indices = @transform_8, window_bounds = array<i64: 2, 16, 32>}, {pipeline_mode = #tpu.pipeline_mode<synchronous>, transform_indices = @transform_9, window_bounds = array<i64: 1, 32>}, {pipeline_mode = #tpu.pipeline_mode<synchronous>, transform_indices = @transform_10, window_bounds = array<i64: 1, 32>}, {pipeline_mode = #tpu.pipeline_mode<synchronous>, transform_indices = @transform_11, window_bounds = array<i64: 1, 32>}, {transform_indices = @transform_12, window_bounds = array<i64: 1, 8, 32>}]} {
    %c0 = arith.constant 0 : index
    %c0_0 = arith.constant 0 : index
    %c0_1 = arith.constant 0 : index
    %0 = vector.load %arg1[%c0, %c0_0, %c0_1] : memref<1x8x32xbf16, #tpu.memory_space<vmem>>, vector<1x8x32xbf16>
    %1 = vector.shape_cast %0 : vector<1x8x32xbf16> to vector<8x32xbf16>
    %c0_2 = arith.constant 0 : index
    %c0_3 = arith.constant 0 : index
    %c0_4 = arith.constant 0 : index
    %2 = vector.load %arg2[%c0_2, %c0_3, %c0_4] : memref<1x1x8xf32, #tpu.memory_space<vmem>>, vector<1x1x8xf32>
    %3 = vector.shape_cast %2 : vector<1x1x8xf32> to vector<1x8xf32>
    %c0_5 = arith.constant 0 : index
    %c0_6 = arith.constant 0 : index
    %4 = vector.load %arg10[%c0_5, %c0_6] : memref<1x32xf32, #tpu.memory_space<vmem>>, vector<1x32xf32>
    %5 = arith.extf %1 : vector<8x32xbf16> to vector<8x32xf32>
    %6 = vector.broadcast %4 : vector<1x32xf32> to vector<8x32xf32>
    %7 = arith.addf %6, %5 : vector<8x32xf32>
    %c0_7 = arith.constant 0 : index
    %c0_8 = arith.constant 0 : index
    %c0_9 = arith.constant 0 : index
    %8 = vector.load %arg3[%c0_7, %c0_8, %c0_9] : memref<2x32x16xbf16, #tpu.memory_space<vmem>>, vector<1x32x16xbf16>
    %9 = vector.shape_cast %8 : vector<1x32x16xbf16> to vector<32x16xbf16>
    %cst = arith.constant dense<0.000000e+00> : vector<8x16xf32>
    %10 = tpu.matmul %1, %9, %cst {dimension_numbers = #tpu.dot_dimension_numbers<[1], [0], [0], [1], [0, 0, 1, 1], [], []>} : vector<8x32xbf16>, vector<32x16xbf16>, vector<8x16xf32> -> vector<8x16xf32>
    %c0_10 = arith.constant 0 : index
    %c0_11 = arith.constant 0 : index
    %c0_12 = arith.constant 0 : index
    %11 = vector.load %arg6[%c0_10, %c0_11, %c0_12] : memref<2x1x16xf32, #tpu.memory_space<vmem>>, vector<1x1x16xf32>
    %12 = vector.shape_cast %11 : vector<1x1x16xf32> to vector<1x16xf32>
    %13 = vector.broadcast %12 : vector<1x16xf32> to vector<8x16xf32>
    %14 = arith.addf %10, %13 : vector<8x16xf32>
    %c0_13 = arith.constant 0 : index
    %c0_14 = arith.constant 0 : index
    %c0_15 = arith.constant 0 : index
    %15 = vector.load %arg4[%c0_13, %c0_14, %c0_15] : memref<2x32x16xbf16, #tpu.memory_space<vmem>>, vector<1x32x16xbf16>
    %16 = vector.shape_cast %15 : vector<1x32x16xbf16> to vector<32x16xbf16>
    %cst_16 = arith.constant dense<0.000000e+00> : vector<8x16xf32>
    %17 = tpu.matmul %1, %16, %cst_16 {dimension_numbers = #tpu.dot_dimension_numbers<[1], [0], [0], [1], [0, 0, 1, 1], [], []>} : vector<8x32xbf16>, vector<32x16xbf16>, vector<8x16xf32> -> vector<8x16xf32>
    %c0_17 = arith.constant 0 : index
    %c0_18 = arith.constant 0 : index
    %c0_19 = arith.constant 0 : index
    %18 = vector.load %arg7[%c0_17, %c0_18, %c0_19] : memref<2x1x16xf32, #tpu.memory_space<vmem>>, vector<1x1x16xf32>
    %19 = vector.shape_cast %18 : vector<1x1x16xf32> to vector<1x16xf32>
    %20 = vector.broadcast %19 : vector<1x16xf32> to vector<8x16xf32>
    %21 = arith.addf %17, %20 : vector<8x16xf32>
    %c0_20 = arith.constant 0 : index
    %c0_21 = arith.constant 0 : index
    %c0_22 = arith.constant 0 : index
    %22 = vector.load %arg5[%c0_20, %c0_21, %c0_22] : memref<2x32x16xbf16, #tpu.memory_space<vmem>>, vector<1x32x16xbf16>
    %23 = vector.shape_cast %22 : vector<1x32x16xbf16> to vector<32x16xbf16>
    %cst_23 = arith.constant dense<0.000000e+00> : vector<8x16xf32>
    %24 = tpu.matmul %1, %23, %cst_23 {dimension_numbers = #tpu.dot_dimension_numbers<[1], [0], [0], [1], [0, 0, 1, 1], [], []>} : vector<8x32xbf16>, vector<32x16xbf16>, vector<8x16xf32> -> vector<8x16xf32>
    %c0_24 = arith.constant 0 : index
    %c0_25 = arith.constant 0 : index
    %c0_26 = arith.constant 0 : index
    %25 = vector.load %arg8[%c0_24, %c0_25, %c0_26] : memref<2x1x16xf32, #tpu.memory_space<vmem>>, vector<1x1x16xf32>
    %26 = vector.shape_cast %25 : vector<1x1x16xf32> to vector<1x16xf32>
    %27 = vector.broadcast %26 : vector<1x16xf32> to vector<8x16xf32>
    %28 = arith.addf %24, %27 : vector<8x16xf32>
    %29 = arith.truncf %14 : vector<8x16xf32> to vector<8x16xbf16>
    %30 = arith.truncf %21 : vector<8x16xf32> to vector<8x16xbf16>
    %cst_27 = arith.constant dense<0.000000e+00> : vector<8x8xf32>
    %31 = tpu.matmul %29, %30, %cst_27 {dimension_numbers = #tpu.dot_dimension_numbers<[1], [1], [0], [0], [0, 0, 1, 0], [], []>} : vector<8x16xbf16>, vector<8x16xbf16>, vector<8x8xf32> -> vector<8x8xf32>
    %cst_28 = arith.constant 2.500000e-01 : f32
    %32 = vector.broadcast %cst_28 : f32 to vector<8x8xf32>
    %33 = arith.mulf %31, %32 : vector<8x8xf32>
    %cst_29 = arith.constant 0.000000e+00 : f32
    %34 = vector.broadcast %cst_29 : f32 to vector<1x8xf32>
    %35 = arith.cmpf ogt, %3, %34 : vector<1x8xf32>
    %cst_30 = arith.constant -1.000000e+30 : f32
    %36 = vector.shape_cast %35 : vector<1x8xi1> to vector<1x8xi1>
    %37 = vector.broadcast %36 : vector<1x8xi1> to vector<8x8xi1>
    %38 = vector.broadcast %cst_30 : f32 to vector<8x8xf32>
    %39 = arith.select %37, %33, %38 : vector<8x8xi1>, vector<8x8xf32>
    %cst_31 = arith.constant dense<0xFF800000> : vector<8xf32>
    %40 = vector.multi_reduction <maximumf>, %39, %cst_31 [1] : vector<8x8xf32> to vector<8xf32>
    %41 = vector.shape_cast %40 : vector<8xf32> to vector<8x1xf32>
    %42 = vector.broadcast %41 : vector<8x1xf32> to vector<8x8xf32>
    %43 = arith.subf %39, %42 : vector<8x8xf32>
    %44 = math.exp %43 : vector<8x8xf32>
    %cst_32 = arith.constant dense<0.000000e+00> : vector<8xf32>
    %45 = vector.multi_reduction <add>, %44, %cst_32 [1] : vector<8x8xf32> to vector<8xf32>
    %46 = vector.shape_cast %45 : vector<8xf32> to vector<8x1xf32>
    %47 = tpu.reciprocal %46 {approx = true} : vector<8x1xf32> -> vector<8x1xf32>
    %48 = vector.broadcast %47 : vector<8x1xf32> to vector<8x8xf32>
    %49 = arith.mulf %44, %48 : vector<8x8xf32>
    %50 = arith.truncf %49 : vector<8x8xf32> to vector<8x8xbf16>
    %51 = arith.truncf %28 : vector<8x16xf32> to vector<8x16xbf16>
    %cst_33 = arith.constant dense<0.000000e+00> : vector<8x16xf32>
    %52 = tpu.matmul %50, %51, %cst_33 {dimension_numbers = #tpu.dot_dimension_numbers<[1], [0], [0], [1], [0, 0, 1, 1], [], []>} : vector<8x8xbf16>, vector<8x16xbf16>, vector<8x16xf32> -> vector<8x16xf32>
    %53 = arith.truncf %52 : vector<8x16xf32> to vector<8x16xbf16>
    %c0_34 = arith.constant 0 : index
    %c0_35 = arith.constant 0 : index
    %c0_36 = arith.constant 0 : index
    %54 = vector.load %arg9[%c0_34, %c0_35, %c0_36] : memref<2x16x32xbf16, #tpu.memory_space<vmem>>, vector<1x16x32xbf16>
    %55 = vector.shape_cast %54 : vector<1x16x32xbf16> to vector<16x32xbf16>
    %cst_37 = arith.constant dense<0.000000e+00> : vector<8x32xf32>
    %56 = tpu.matmul %53, %55, %cst_37 {dimension_numbers = #tpu.dot_dimension_numbers<[1], [0], [0], [1], [0, 0, 1, 1], [], []>} : vector<8x16xbf16>, vector<16x32xbf16>, vector<8x32xf32> -> vector<8x32xf32>
    %57 = arith.addf %7, %56 : vector<8x32xf32>
    %c1 = arith.constant 1 : index
    %c0_38 = arith.constant 0 : index
    %c0_39 = arith.constant 0 : index
    %58 = vector.load %arg3[%c1, %c0_38, %c0_39] : memref<2x32x16xbf16, #tpu.memory_space<vmem>>, vector<1x32x16xbf16>
    %59 = vector.shape_cast %58 : vector<1x32x16xbf16> to vector<32x16xbf16>
    %cst_40 = arith.constant dense<0.000000e+00> : vector<8x16xf32>
    %60 = tpu.matmul %1, %59, %cst_40 {dimension_numbers = #tpu.dot_dimension_numbers<[1], [0], [0], [1], [0, 0, 1, 1], [], []>} : vector<8x32xbf16>, vector<32x16xbf16>, vector<8x16xf32> -> vector<8x16xf32>
    %c1_41 = arith.constant 1 : index
    %c0_42 = arith.constant 0 : index
    %c0_43 = arith.constant 0 : index
    %61 = vector.load %arg6[%c1_41, %c0_42, %c0_43] : memref<2x1x16xf32, #tpu.memory_space<vmem>>, vector<1x1x16xf32>
    %62 = vector.shape_cast %61 : vector<1x1x16xf32> to vector<1x16xf32>
    %63 = vector.broadcast %62 : vector<1x16xf32> to vector<8x16xf32>
    %64 = arith.addf %60, %63 : vector<8x16xf32>
    %c1_44 = arith.constant 1 : index
    %c0_45 = arith.constant 0 : index
    %c0_46 = arith.constant 0 : index
    %65 = vector.load %arg4[%c1_44, %c0_45, %c0_46] : memref<2x32x16xbf16, #tpu.memory_space<vmem>>, vector<1x32x16xbf16>
    %66 = vector.shape_cast %65 : vector<1x32x16xbf16> to vector<32x16xbf16>
    %cst_47 = arith.constant dense<0.000000e+00> : vector<8x16xf32>
    %67 = tpu.matmul %1, %66, %cst_47 {dimension_numbers = #tpu.dot_dimension_numbers<[1], [0], [0], [1], [0, 0, 1, 1], [], []>} : vector<8x32xbf16>, vector<32x16xbf16>, vector<8x16xf32> -> vector<8x16xf32>
    %c1_48 = arith.constant 1 : index
    %c0_49 = arith.constant 0 : index
    %c0_50 = arith.constant 0 : index
    %68 = vector.load %arg7[%c1_48, %c0_49, %c0_50] : memref<2x1x16xf32, #tpu.memory_space<vmem>>, vector<1x1x16xf32>
    %69 = vector.shape_cast %68 : vector<1x1x16xf32> to vector<1x16xf32>
    %70 = vector.broadcast %69 : vector<1x16xf32> to vector<8x16xf32>
    %71 = arith.addf %67, %70 : vector<8x16xf32>
    %c1_51 = arith.constant 1 : index
    %c0_52 = arith.constant 0 : index
    %c0_53 = arith.constant 0 : index
    %72 = vector.load %arg5[%c1_51, %c0_52, %c0_53] : memref<2x32x16xbf16, #tpu.memory_space<vmem>>, vector<1x32x16xbf16>
    %73 = vector.shape_cast %72 : vector<1x32x16xbf16> to vector<32x16xbf16>
    %cst_54 = arith.constant dense<0.000000e+00> : vector<8x16xf32>
    %74 = tpu.matmul %1, %73, %cst_54 {dimension_numbers = #tpu.dot_dimension_numbers<[1], [0], [0], [1], [0, 0, 1, 1], [], []>} : vector<8x32xbf16>, vector<32x16xbf16>, vector<8x16xf32> -> vector<8x16xf32>
    %c1_55 = arith.constant 1 : index
    %c0_56 = arith.constant 0 : index
    %c0_57 = arith.constant 0 : index
    %75 = vector.load %arg8[%c1_55, %c0_56, %c0_57] : memref<2x1x16xf32, #tpu.memory_space<vmem>>, vector<1x1x16xf32>
    %76 = vector.shape_cast %75 : vector<1x1x16xf32> to vector<1x16xf32>
    %77 = vector.broadcast %76 : vector<1x16xf32> to vector<8x16xf32>
    %78 = arith.addf %74, %77 : vector<8x16xf32>
    %79 = arith.truncf %64 : vector<8x16xf32> to vector<8x16xbf16>
    %80 = arith.truncf %71 : vector<8x16xf32> to vector<8x16xbf16>
    %cst_58 = arith.constant dense<0.000000e+00> : vector<8x8xf32>
    %81 = tpu.matmul %79, %80, %cst_58 {dimension_numbers = #tpu.dot_dimension_numbers<[1], [1], [0], [0], [0, 0, 1, 0], [], []>} : vector<8x16xbf16>, vector<8x16xbf16>, vector<8x8xf32> -> vector<8x8xf32>
    %cst_59 = arith.constant 2.500000e-01 : f32
    %82 = vector.broadcast %cst_59 : f32 to vector<8x8xf32>
    %83 = arith.mulf %81, %82 : vector<8x8xf32>
    %cst_60 = arith.constant 0.000000e+00 : f32
    %84 = vector.broadcast %cst_60 : f32 to vector<1x8xf32>
    %85 = arith.cmpf ogt, %3, %84 : vector<1x8xf32>
    %cst_61 = arith.constant -1.000000e+30 : f32
    %86 = vector.shape_cast %85 : vector<1x8xi1> to vector<1x8xi1>
    %87 = vector.broadcast %86 : vector<1x8xi1> to vector<8x8xi1>
    %88 = vector.broadcast %cst_61 : f32 to vector<8x8xf32>
    %89 = arith.select %87, %83, %88 : vector<8x8xi1>, vector<8x8xf32>
    %cst_62 = arith.constant dense<0xFF800000> : vector<8xf32>
    %90 = vector.multi_reduction <maximumf>, %89, %cst_62 [1] : vector<8x8xf32> to vector<8xf32>
    %91 = vector.shape_cast %90 : vector<8xf32> to vector<8x1xf32>
    %92 = vector.broadcast %91 : vector<8x1xf32> to vector<8x8xf32>
    %93 = arith.subf %89, %92 : vector<8x8xf32>
    %94 = math.exp %93 : vector<8x8xf32>
    %cst_63 = arith.constant dense<0.000000e+00> : vector<8xf32>
    %95 = vector.multi_reduction <add>, %94, %cst_63 [1] : vector<8x8xf32> to vector<8xf32>
    %96 = vector.shape_cast %95 : vector<8xf32> to vector<8x1xf32>
    %97 = tpu.reciprocal %96 {approx = true} : vector<8x1xf32> -> vector<8x1xf32>
    %98 = vector.broadcast %97 : vector<8x1xf32> to vector<8x8xf32>
    %99 = arith.mulf %94, %98 : vector<8x8xf32>
    %100 = arith.truncf %99 : vector<8x8xf32> to vector<8x8xbf16>
    %101 = arith.truncf %78 : vector<8x16xf32> to vector<8x16xbf16>
    %cst_64 = arith.constant dense<0.000000e+00> : vector<8x16xf32>
    %102 = tpu.matmul %100, %101, %cst_64 {dimension_numbers = #tpu.dot_dimension_numbers<[1], [0], [0], [1], [0, 0, 1, 1], [], []>} : vector<8x8xbf16>, vector<8x16xbf16>, vector<8x16xf32> -> vector<8x16xf32>
    %103 = arith.truncf %102 : vector<8x16xf32> to vector<8x16xbf16>
    %c1_65 = arith.constant 1 : index
    %c0_66 = arith.constant 0 : index
    %c0_67 = arith.constant 0 : index
    %104 = vector.load %arg9[%c1_65, %c0_66, %c0_67] : memref<2x16x32xbf16, #tpu.memory_space<vmem>>, vector<1x16x32xbf16>
    %105 = vector.shape_cast %104 : vector<1x16x32xbf16> to vector<16x32xbf16>
    %cst_68 = arith.constant dense<0.000000e+00> : vector<8x32xf32>
    %106 = tpu.matmul %103, %105, %cst_68 {dimension_numbers = #tpu.dot_dimension_numbers<[1], [0], [0], [1], [0, 0, 1, 1], [], []>} : vector<8x16xbf16>, vector<16x32xbf16>, vector<8x32xf32> -> vector<8x32xf32>
    %107 = arith.addf %57, %106 : vector<8x32xf32>
    %c0_69 = arith.constant 0 : index
    %c0_70 = arith.constant 0 : index
    %108 = vector.load %arg11[%c0_69, %c0_70] : memref<1x32xf32, #tpu.memory_space<vmem>>, vector<1x32xf32>
    %c0_71 = arith.constant 0 : index
    %c0_72 = arith.constant 0 : index
    %109 = vector.load %arg12[%c0_71, %c0_72] : memref<1x32xf32, #tpu.memory_space<vmem>>, vector<1x32xf32>
    %cst_73 = arith.constant dense<0.000000e+00> : vector<8xf32>
    %110 = vector.multi_reduction <add>, %107, %cst_73 [1] : vector<8x32xf32> to vector<8xf32>
    %111 = vector.shape_cast %110 : vector<8xf32> to vector<8x1xf32>
    %cst_74 = arith.constant 3.200000e+01 : f32
    %112 = vector.broadcast %cst_74 : f32 to vector<8x1xf32>
    %113 = arith.divf %111, %112 : vector<8x1xf32>
    %114 = vector.broadcast %113 : vector<8x1xf32> to vector<8x32xf32>
    %115 = arith.subf %107, %114 : vector<8x32xf32>
    %116 = arith.mulf %115, %115 : vector<8x32xf32>
    %cst_75 = arith.constant dense<0.000000e+00> : vector<8xf32>
    %117 = vector.multi_reduction <add>, %116, %cst_75 [1] : vector<8x32xf32> to vector<8xf32>
    %118 = vector.shape_cast %117 : vector<8xf32> to vector<8x1xf32>
    %cst_76 = arith.constant 3.200000e+01 : f32
    %119 = vector.broadcast %cst_76 : f32 to vector<8x1xf32>
    %120 = arith.divf %118, %119 : vector<8x1xf32>
    %121 = vector.broadcast %113 : vector<8x1xf32> to vector<8x32xf32>
    %122 = arith.subf %107, %121 : vector<8x32xf32>
    %cst_77 = arith.constant 9.99999974E-6 : f32
    %123 = vector.broadcast %cst_77 : f32 to vector<8x1xf32>
    %124 = arith.addf %120, %123 : vector<8x1xf32>
    %125 = math.rsqrt %124 : vector<8x1xf32>
    %126 = vector.broadcast %125 : vector<8x1xf32> to vector<8x32xf32>
    %127 = arith.mulf %122, %126 : vector<8x32xf32>
    %128 = vector.broadcast %108 : vector<1x32xf32> to vector<8x32xf32>
    %129 = arith.mulf %127, %128 : vector<8x32xf32>
    %130 = vector.broadcast %109 : vector<1x32xf32> to vector<8x32xf32>
    %131 = arith.addf %129, %130 : vector<8x32xf32>
    %132 = arith.truncf %131 : vector<8x32xf32> to vector<8x32xbf16>
    %c0_78 = arith.constant 0 : index
    %c0_79 = arith.constant 0 : index
    %c0_80 = arith.constant 0 : index
    %133 = vector.load %arg13[%c0_78, %c0_79, %c0_80] : memref<1x8x32xbf16, #tpu.memory_space<vmem>>, vector<1x8x32xbf16>
    %134 = vector.shape_cast %133 : vector<1x8x32xbf16> to vector<8x32xbf16>
    %135 = vector.shape_cast %132 : vector<8x32xbf16> to vector<1x8x32xbf16>
    tpu.vector_store %arg13[%c0_78, %c0_79, %c0_80], %135 {strides = array<i32>} : memref<1x8x32xbf16, #tpu.memory_space<vmem>>, vector<1x8x32xbf16>,
    return
  }
  func.func @transform_0(%arg0: i32) -> (i32, i32, i32) {
    %c0_i32 = arith.constant 0 : i32
    %c0_i32_0 = arith.constant 0 : i32
    %c0_i32_1 = arith.constant 0 : i32
    return %arg0, %c0_i32, %c0_i32_0 : i32, i32, i32
  }
  func.func @transform_1(%arg0: i32) -> (i32, i32, i32) {
    %c0_i32 = arith.constant 0 : i32
    %c0_i32_0 = arith.constant 0 : i32
    %c0_i32_1 = arith.constant 0 : i32
    return %arg0, %c0_i32, %c0_i32_0 : i32, i32, i32
  }
  func.func @transform_2(%arg0: i32) -> (i32, i32, i32) {
    %c0_i32 = arith.constant 0 : i32
    %c0_i32_0 = arith.constant 0 : i32
    %c0_i32_1 = arith.constant 0 : i32
    %c0_i32_2 = arith.constant 0 : i32
    return %c0_i32, %c0_i32_0, %c0_i32_1 : i32, i32, i32
  }
  func.func @transform_3(%arg0: i32) -> (i32, i32, i32) {
    %c0_i32 = arith.constant 0 : i32
    %c0_i32_0 = arith.constant 0 : i32
    %c0_i32_1 = arith.constant 0 : i32
    %c0_i32_2 = arith.constant 0 : i32
    return %c0_i32, %c0_i32_0, %c0_i32_1 : i32, i32, i32
  }
  func.func @transform_4(%arg0: i32) -> (i32, i32, i32) {
    %c0_i32 = arith.constant 0 : i32
    %c0_i32_0 = arith.constant 0 : i32
    %c0_i32_1 = arith.constant 0 : i32
    %c0_i32_2 = arith.constant 0 : i32
    return %c0_i32, %c0_i32_0, %c0_i32_1 : i32, i32, i32
  }
  func.func @transform_5(%arg0: i32) -> (i32, i32, i32) {
    %c0_i32 = arith.constant 0 : i32
    %c0_i32_0 = arith.constant 0 : i32
    %c0_i32_1 = arith.constant 0 : i32
    %c0_i32_2 = arith.constant 0 : i32
    return %c0_i32, %c0_i32_0, %c0_i32_1 : i32, i32, i32
  }
  func.func @transform_6(%arg0: i32) -> (i32, i32, i32) {
    %c0_i32 = arith.constant 0 : i32
    %c0_i32_0 = arith.constant 0 : i32
    %c0_i32_1 = arith.constant 0 : i32
    %c0_i32_2 = arith.constant 0 : i32
    return %c0_i32, %c0_i32_0, %c0_i32_1 : i32, i32, i32
  }
  func.func @transform_7(%arg0: i32) -> (i32, i32, i32) {
    %c0_i32 = arith.constant 0 : i32
    %c0_i32_0 = arith.constant 0 : i32
    %c0_i32_1 = arith.constant 0 : i32
    %c0_i32_2 = arith.constant 0 : i32
    return %c0_i32, %c0_i32_0, %c0_i32_1 : i32, i32, i32
  }
  func.func @transform_8(%arg0: i32) -> (i32, i32, i32) {
    %c0_i32 = arith.constant 0 : i32
    %c0_i32_0 = arith.constant 0 : i32
    %c0_i32_1 = arith.constant 0 : i32
    %c0_i32_2 = arith.constant 0 : i32
    return %c0_i32, %c0_i32_0, %c0_i32_1 : i32, i32, i32
  }
  func.func @transform_9(%arg0: i32) -> (i32, i32) {
    %c0_i32 = arith.constant 0 : i32
    %c0_i32_0 = arith.constant 0 : i32
    %c0_i32_1 = arith.constant 0 : i32
    return %c0_i32, %c0_i32_0 : i32, i32
  }
  func.func @transform_10(%arg0: i32) -> (i32, i32) {
    %c0_i32 = arith.constant 0 : i32
    %c0_i32_0 = arith.constant 0 : i32
    %c0_i32_1 = arith.constant 0 : i32
    return %c0_i32, %c0_i32_0 : i32, i32
  }
  func.func @transform_11(%arg0: i32) -> (i32, i32) {
    %c0_i32 = arith.constant 0 : i32
    %c0_i32_0 = arith.constant 0 : i32
    %c0_i32_1 = arith.constant 0 : i32
    return %c0_i32, %c0_i32_0 : i32, i32
  }
  func.func @transform_12(%arg0: i32) -> (i32, i32, i32) {
    %c0_i32 = arith.constant 0 : i32
    %c0_i32_0 = arith.constant 0 : i32
    %c0_i32_1 = arith.constant 0 : i32
    return %arg0, %c0_i32, %c0_i32_0 : i32, i32, i32
  }
}

module attributes {stable_mosaic.version = 11 : i64} {
  func.func @_ffn_res_ln_kernel(%arg0: i32, %arg1: memref<64x32xbf16, #tpu.memory_space<vmem>>, %arg2: memref<32x64xbf16, #tpu.memory_space<vmem>>, %arg3: memref<1x64xf32, #tpu.memory_space<vmem>>, %arg4: memref<64x32xbf16, #tpu.memory_space<vmem>>, %arg5: memref<1x32xf32, #tpu.memory_space<vmem>>, %arg6: memref<1x32xf32, #tpu.memory_space<vmem>>, %arg7: memref<1x32xf32, #tpu.memory_space<vmem>>, %arg8: memref<64x1xf32, #tpu.memory_space<vmem>>, %arg9: memref<64x32xbf16, #tpu.memory_space<vmem>>) attributes {dimension_semantics = [#tpu.dimension_semantics<parallel>], iteration_bounds = array<i64: 1>, scalar_prefetch = 0 : i64, scratch_operands = 0 : i64, tpu.core_type = #tpu.core_type<tc>, window_params = [{transform_indices = @transform_0, window_bounds = array<i64: 64, 32>}, {pipeline_mode = #tpu.pipeline_mode<synchronous>, transform_indices = @transform_1, window_bounds = array<i64: 32, 64>}, {pipeline_mode = #tpu.pipeline_mode<synchronous>, transform_indices = @transform_2, window_bounds = array<i64: 1, 64>}, {pipeline_mode = #tpu.pipeline_mode<synchronous>, transform_indices = @transform_3, window_bounds = array<i64: 64, 32>}, {pipeline_mode = #tpu.pipeline_mode<synchronous>, transform_indices = @transform_4, window_bounds = array<i64: 1, 32>}, {pipeline_mode = #tpu.pipeline_mode<synchronous>, transform_indices = @transform_5, window_bounds = array<i64: 1, 32>}, {pipeline_mode = #tpu.pipeline_mode<synchronous>, transform_indices = @transform_6, window_bounds = array<i64: 1, 32>}, {transform_indices = @transform_7, window_bounds = array<i64: 64, 1>}, {transform_indices = @transform_8, window_bounds = array<i64: 64, 32>}]} {
    %c0 = arith.constant 0 : index
    %c0_0 = arith.constant 0 : index
    %0 = vector.load %arg1[%c0, %c0_0] : memref<64x32xbf16, #tpu.memory_space<vmem>>, vector<64x32xbf16>
    %c0_1 = arith.constant 0 : index
    %c0_2 = arith.constant 0 : index
    %1 = vector.load %arg2[%c0_1, %c0_2] : memref<32x64xbf16, #tpu.memory_space<vmem>>, vector<32x64xbf16>
    %cst = arith.constant dense<0.000000e+00> : vector<64x64xf32>
    %2 = tpu.matmul %0, %1, %cst {dimension_numbers = #tpu.dot_dimension_numbers<[1], [0], [0], [1], [0, 0, 1, 1], [], []>} : vector<64x32xbf16>, vector<32x64xbf16>, vector<64x64xf32> -> vector<64x64xf32>
    %c0_3 = arith.constant 0 : index
    %c0_4 = arith.constant 0 : index
    %3 = vector.load %arg3[%c0_3, %c0_4] : memref<1x64xf32, #tpu.memory_space<vmem>>, vector<1x64xf32>
    %4 = vector.broadcast %3 : vector<1x64xf32> to vector<64x64xf32>
    %5 = arith.addf %2, %4 : vector<64x64xf32>
    %cst_5 = arith.constant 0.000000e+00 : f32
    %6 = vector.broadcast %cst_5 : f32 to vector<64x64xf32>
    %7 = arith.maximumf %5, %6 : vector<64x64xf32>
    %8 = arith.truncf %7 : vector<64x64xf32> to vector<64x64xbf16>
    %c0_6 = arith.constant 0 : index
    %c0_7 = arith.constant 0 : index
    %9 = vector.load %arg4[%c0_6, %c0_7] : memref<64x32xbf16, #tpu.memory_space<vmem>>, vector<64x32xbf16>
    %cst_8 = arith.constant dense<0.000000e+00> : vector<64x32xf32>
    %10 = tpu.matmul %8, %9, %cst_8 {dimension_numbers = #tpu.dot_dimension_numbers<[1], [0], [0], [1], [0, 0, 1, 1], [], []>} : vector<64x64xbf16>, vector<64x32xbf16>, vector<64x32xf32> -> vector<64x32xf32>
    %c0_9 = arith.constant 0 : index
    %c0_10 = arith.constant 0 : index
    %11 = vector.load %arg5[%c0_9, %c0_10] : memref<1x32xf32, #tpu.memory_space<vmem>>, vector<1x32xf32>
    %12 = vector.broadcast %11 : vector<1x32xf32> to vector<64x32xf32>
    %13 = arith.addf %10, %12 : vector<64x32xf32>
    %14 = arith.extf %0 : vector<64x32xbf16> to vector<64x32xf32>
    %15 = arith.addf %13, %14 : vector<64x32xf32>
    %c0_11 = arith.constant 0 : index
    %c0_12 = arith.constant 0 : index
    %16 = vector.load %arg6[%c0_11, %c0_12] : memref<1x32xf32, #tpu.memory_space<vmem>>, vector<1x32xf32>
    %c0_13 = arith.constant 0 : index
    %c0_14 = arith.constant 0 : index
    %17 = vector.load %arg7[%c0_13, %c0_14] : memref<1x32xf32, #tpu.memory_space<vmem>>, vector<1x32xf32>
    %cst_15 = arith.constant dense<0.000000e+00> : vector<64xf32>
    %18 = vector.multi_reduction <add>, %15, %cst_15 [1] : vector<64x32xf32> to vector<64xf32>
    %19 = vector.shape_cast %18 : vector<64xf32> to vector<64x1xf32>
    %cst_16 = arith.constant 3.200000e+01 : f32
    %20 = vector.broadcast %cst_16 : f32 to vector<64x1xf32>
    %21 = arith.divf %19, %20 : vector<64x1xf32>
    %22 = vector.broadcast %21 : vector<64x1xf32> to vector<64x32xf32>
    %23 = arith.subf %15, %22 : vector<64x32xf32>
    %24 = arith.mulf %23, %23 : vector<64x32xf32>
    %cst_17 = arith.constant dense<0.000000e+00> : vector<64xf32>
    %25 = vector.multi_reduction <add>, %24, %cst_17 [1] : vector<64x32xf32> to vector<64xf32>
    %26 = vector.shape_cast %25 : vector<64xf32> to vector<64x1xf32>
    %cst_18 = arith.constant 3.200000e+01 : f32
    %27 = vector.broadcast %cst_18 : f32 to vector<64x1xf32>
    %28 = arith.divf %26, %27 : vector<64x1xf32>
    %29 = vector.broadcast %21 : vector<64x1xf32> to vector<64x32xf32>
    %30 = arith.subf %15, %29 : vector<64x32xf32>
    %cst_19 = arith.constant 9.99999974E-6 : f32
    %31 = vector.broadcast %cst_19 : f32 to vector<64x1xf32>
    %32 = arith.addf %28, %31 : vector<64x1xf32>
    %33 = math.rsqrt %32 : vector<64x1xf32>
    %34 = vector.broadcast %33 : vector<64x1xf32> to vector<64x32xf32>
    %35 = arith.mulf %30, %34 : vector<64x32xf32>
    %36 = vector.broadcast %16 : vector<1x32xf32> to vector<64x32xf32>
    %37 = arith.mulf %35, %36 : vector<64x32xf32>
    %38 = vector.broadcast %17 : vector<1x32xf32> to vector<64x32xf32>
    %39 = arith.addf %37, %38 : vector<64x32xf32>
    %c0_20 = arith.constant 0 : index
    %c0_21 = arith.constant 0 : index
    %40 = vector.load %arg8[%c0_20, %c0_21] : memref<64x1xf32, #tpu.memory_space<vmem>>, vector<64x1xf32>
    %41 = vector.broadcast %40 : vector<64x1xf32> to vector<64x32xf32>
    %42 = arith.mulf %39, %41 : vector<64x32xf32>
    %43 = arith.truncf %42 : vector<64x32xf32> to vector<64x32xbf16>
    %c0_22 = arith.constant 0 : index
    %c0_23 = arith.constant 0 : index
    %44 = vector.load %arg9[%c0_22, %c0_23] : memref<64x32xbf16, #tpu.memory_space<vmem>>, vector<64x32xbf16>
    tpu.vector_store %arg9[%c0_22, %c0_23], %43 {strides = array<i32>} : memref<64x32xbf16, #tpu.memory_space<vmem>>, vector<64x32xbf16>,
    return
  }
  func.func @transform_0(%arg0: i32) -> (i32, i32) {
    %c0_i32 = arith.constant 0 : i32
    %c0_i32_0 = arith.constant 0 : i32
    return %arg0, %c0_i32 : i32, i32
  }
  func.func @transform_1(%arg0: i32) -> (i32, i32) {
    %c0_i32 = arith.constant 0 : i32
    %c0_i32_0 = arith.constant 0 : i32
    %c0_i32_1 = arith.constant 0 : i32
    return %c0_i32, %c0_i32_0 : i32, i32
  }
  func.func @transform_2(%arg0: i32) -> (i32, i32) {
    %c0_i32 = arith.constant 0 : i32
    %c0_i32_0 = arith.constant 0 : i32
    %c0_i32_1 = arith.constant 0 : i32
    return %c0_i32, %c0_i32_0 : i32, i32
  }
  func.func @transform_3(%arg0: i32) -> (i32, i32) {
    %c0_i32 = arith.constant 0 : i32
    %c0_i32_0 = arith.constant 0 : i32
    %c0_i32_1 = arith.constant 0 : i32
    return %c0_i32, %c0_i32_0 : i32, i32
  }
  func.func @transform_4(%arg0: i32) -> (i32, i32) {
    %c0_i32 = arith.constant 0 : i32
    %c0_i32_0 = arith.constant 0 : i32
    %c0_i32_1 = arith.constant 0 : i32
    return %c0_i32, %c0_i32_0 : i32, i32
  }
  func.func @transform_5(%arg0: i32) -> (i32, i32) {
    %c0_i32 = arith.constant 0 : i32
    %c0_i32_0 = arith.constant 0 : i32
    %c0_i32_1 = arith.constant 0 : i32
    return %c0_i32, %c0_i32_0 : i32, i32
  }
  func.func @transform_6(%arg0: i32) -> (i32, i32) {
    %c0_i32 = arith.constant 0 : i32
    %c0_i32_0 = arith.constant 0 : i32
    %c0_i32_1 = arith.constant 0 : i32
    return %c0_i32, %c0_i32_0 : i32, i32
  }
  func.func @transform_7(%arg0: i32) -> (i32, i32) {
    %c0_i32 = arith.constant 0 : i32
    %c0_i32_0 = arith.constant 0 : i32
    return %arg0, %c0_i32 : i32, i32
  }
  func.func @transform_8(%arg0: i32) -> (i32, i32) {
    %c0_i32 = arith.constant 0 : i32
    %c0_i32_0 = arith.constant 0 : i32
    return %arg0, %c0_i32 : i32, i32
  }
}

module attributes {stable_mosaic.version = 11 : i64} {
  func.func @_masked_mean_kernel(%arg0: i32, %arg1: memref<8x8x32xbf16, #tpu.memory_space<vmem>>, %arg2: memref<8x8x1xf32, #tpu.memory_space<vmem>>, %arg3: memref<8x32xf32, #tpu.memory_space<vmem>>) attributes {dimension_semantics = [#tpu.dimension_semantics<arbitrary>], iteration_bounds = array<i64: 1>, scalar_prefetch = 0 : i64, scratch_operands = 0 : i64, tpu.core_type = #tpu.core_type<tc>, window_params = [{pipeline_mode = #tpu.pipeline_mode<synchronous>, transform_indices = @transform_0, window_bounds = array<i64: 8, 8, 32>}, {pipeline_mode = #tpu.pipeline_mode<synchronous>, transform_indices = @transform_1, window_bounds = array<i64: 8, 8, 1>}, {pipeline_mode = #tpu.pipeline_mode<synchronous>, transform_indices = @transform_2, window_bounds = array<i64: 8, 32>}]} {
    %c0 = arith.constant 0 : index
    %c0_0 = arith.constant 0 : index
    %c0_1 = arith.constant 0 : index
    %0 = vector.load %arg1[%c0, %c0_0, %c0_1] : memref<8x8x32xbf16, #tpu.memory_space<vmem>>, vector<8x8x32xbf16>
    %1 = arith.extf %0 : vector<8x8x32xbf16> to vector<8x8x32xf32>
    %c0_2 = arith.constant 0 : index
    %c0_3 = arith.constant 0 : index
    %c0_4 = arith.constant 0 : index
    %2 = vector.load %arg2[%c0_2, %c0_3, %c0_4] : memref<8x8x1xf32, #tpu.memory_space<vmem>>, vector<8x8x1xf32>
    %3 = vector.broadcast %2 : vector<8x8x1xf32> to vector<8x8x32xf32>
    %4 = arith.mulf %1, %3 : vector<8x8x32xf32>
    %cst = arith.constant dense<0.000000e+00> : vector<8x32xf32>
    %5 = vector.multi_reduction <add>, %4, %cst [1] : vector<8x8x32xf32> to vector<8x32xf32>
    %cst_5 = arith.constant dense<0.000000e+00> : vector<8x1xf32>
    %6 = vector.multi_reduction <add>, %2, %cst_5 [1] : vector<8x8x1xf32> to vector<8x1xf32>
    %cst_6 = arith.constant 1.000000e+00 : f32
    %7 = vector.broadcast %cst_6 : f32 to vector<8x1xf32>
    %8 = arith.maximumf %6, %7 : vector<8x1xf32>
    %9 = vector.broadcast %8 : vector<8x1xf32> to vector<8x32xf32>
    %10 = arith.divf %5, %9 : vector<8x32xf32>
    %c0_7 = arith.constant 0 : index
    %c0_8 = arith.constant 0 : index
    %11 = vector.load %arg3[%c0_7, %c0_8] : memref<8x32xf32, #tpu.memory_space<vmem>>, vector<8x32xf32>
    tpu.vector_store %arg3[%c0_7, %c0_8], %10 {strides = array<i32>} : memref<8x32xf32, #tpu.memory_space<vmem>>, vector<8x32xf32>,
    return
  }
  func.func @transform_0(%arg0: i32) -> (i32, i32, i32) {
    %c0_i32 = arith.constant 0 : i32
    %c0_i32_0 = arith.constant 0 : i32
    %c0_i32_1 = arith.constant 0 : i32
    %c0_i32_2 = arith.constant 0 : i32
    return %c0_i32, %c0_i32_0, %c0_i32_1 : i32, i32, i32
  }
  func.func @transform_1(%arg0: i32) -> (i32, i32, i32) {
    %c0_i32 = arith.constant 0 : i32
    %c0_i32_0 = arith.constant 0 : i32
    %c0_i32_1 = arith.constant 0 : i32
    %c0_i32_2 = arith.constant 0 : i32
    return %c0_i32, %c0_i32_0, %c0_i32_1 : i32, i32, i32
  }
  func.func @transform_2(%arg0: i32) -> (i32, i32) {
    %c0_i32 = arith.constant 0 : i32
    %c0_i32_0 = arith.constant 0 : i32
    %c0_i32_1 = arith.constant 0 : i32
    return %c0_i32, %c0_i32_0 : i32, i32
  }
}

</mosaic_0001>

<llo_original>
// kernel: transformer_encoder.9
$region0: #{transformer_encoder.9}
  #allocation0 [shape = 'u32[]', space=smem, size = 0x4, offset = 0x4, fixed_abs, tag = 'smem constant byte address 0x4 - core index']
  #allocation1 [shape = 'u32[72,128]{1,0:T(1,128)}', space=vmem, size = 0x9000, scoped, tag = 'internal scratch']
  %s0 = inlined_call_operand.vmem [shape: bf16[8,8,32], index: 0, kind: input, shape index: {}]
  %s1 = inlined_call_operand.vmem [shape: f32[8,8,1], index: 1, kind: input, shape index: {}]
  %s2 = inlined_call_operand.vmem [shape: f32[8,32], index: 2, kind: output, shape index: {}]
  %s3 = sld [smem:[#allocation0]]
  $region18: #{transformer_encoder.9} parent=0
    _
  %s5 = ssub.s32 1, %s3
  %s6 = scalar_select 0, %s5, %s3
  // Predicated region
  $region2: #{transformer_encoder.9} parent=0 // pred_check
    _
  $region3: #{transformer_encoder.9} parent=0 // pred_check_branch
    %8 = sbr.rel (0) target = $region5
  $region4: #{transformer_encoder.9} parent=0 // pred_region
    _
  $region5: #{transformer_encoder.9} parent=0 // pred_fallthru
    _
  // Predicated region
  $region6: #{transformer_encoder.9} parent=0 // pred_check
    _
  $region7: #{transformer_encoder.9} parent=0 // pred_check_branch
    %10 = sbr.rel (0) target = $region9
  $region8: #{transformer_encoder.9} parent=0 // pred_region
    _
  $region9: #{transformer_encoder.9} parent=0 // pred_fallthru
    _
  %v11 = vld [vmem:[%s0] sm:$0xf]
  %v12 = vld [vmem:[%s0 + $0x4] sm:$0xf]
  %v13 = vld [vmem:[%s0 + $0x8] sm:$0xf]
  %v14 = vld [vmem:[%s0 + $0xc] sm:$0xf]
  %v15 = vld [vmem:[%s0 + $0x10] sm:$0xf]
  %v16 = vld [vmem:[%s0 + $0x14] sm:$0xf]
  %v17 = vld [vmem:[%s0 + $0x18] sm:$0xf]
  %v18 = vld [vmem:[%s0 + $0x1c] sm:$0xf]
  %v19 = vunpack.c.l.bf16 %v11
  %v20 = vunpack.c.l.bf16 %v12
  %v21 = vunpack.c.l.bf16 %v13
  %v22 = vunpack.c.l.bf16 %v14
  %v23 = vunpack.c.l.bf16 %v15
  %v24 = vunpack.c.l.bf16 %v16
  %v25 = vunpack.c.l.bf16 %v17
  %v26 = vunpack.c.l.bf16 %v18
  %v27 = vld [vmem:[%s1] sm:$0xff]
  %v28 = vld [vmem:[%s1 + $0x8] sm:$0xff]
  %v29 = vld [vmem:[%s1 + $0x10] sm:$0xff]
  %v30 = vld [vmem:[%s1 + $0x18] sm:$0xff]
  %v31 = vld [vmem:[%s1 + $0x20] sm:$0xff]
  %v32 = vld [vmem:[%s1 + $0x28] sm:$0xff]
  %v33 = vld [vmem:[%s1 + $0x30] sm:$0xff]
  %v34 = vld [vmem:[%s1 + $0x38] sm:$0xff]
  %36 = vset.pattern.permute.xlu0 0
  %37 = vperm.xlu0 %36, %v27
  %v38 = vpop.permute.xlu0 %37
  %41 = vset.pattern.permute.xlu0 0
  %42 = vperm.xlu0 %41, %v28
  %v43 = vpop.permute.xlu0 %42
  %46 = vset.pattern.permute.xlu0 0
  %47 = vperm.xlu0 %46, %v29
  %v48 = vpop.permute.xlu0 %47
  %51 = vset.pattern.permute.xlu0 0
  %52 = vperm.xlu0 %51, %v30
  %v53 = vpop.permute.xlu0 %52
  %56 = vset.pattern.permute.xlu0 0
  %57 = vperm.xlu0 %56, %v31
  %v58 = vpop.permute.xlu0 %57
  %61 = vset.pattern.permute.xlu0 0
  %62 = vperm.xlu0 %61, %v32
  %v63 = vpop.permute.xlu0 %62
  %66 = vset.pattern.permute.xlu0 0
  %67 = vperm.xlu0 %66, %v33
  %v68 = vpop.permute.xlu0 %67
  %71 = vset.pattern.permute.xlu0 0
  %72 = vperm.xlu0 %71, %v34
  %v73 = vpop.permute.xlu0 %72
  %v75 = vmul.f32 %v19, %v38
  %v76 = vmul.f32 %v20, %v43
  %v77 = vmul.f32 %v21, %v48
  %v78 = vmul.f32 %v22, %v53
  %v79 = vmul.f32 %v23, %v58
  %v80 = vmul.f32 %v24, %v63
  %v81 = vmul.f32 %v25, %v68
  %v82 = vmul.f32 %v26, %v73
  %vm83 = vcmask 261120
  %v84 = vsel %vm83, %v75, 0.0
  %v85 = vrot.slane %v84, 4
  %v86 = vadd.f32 %v84, %v85
  %v87 = vrot.slane %v86, 2
  %v88 = vadd.f32 %v86, %v87
  %v89 = vrot.slane %v88, 1
  %v90 = vadd.f32 %v88, %v89
  %v91 = vsel %vm83, %v76, 0.0
  %v92 = vrot.slane %v91, 4
  %v93 = vadd.f32 %v91, %v92
  %v94 = vrot.slane %v93, 2
  %v95 = vadd.f32 %v93, %v94
  %v96 = vrot.slane %v95, 1
  %v97 = vadd.f32 %v95, %v96
  %v98 = vsel %vm83, %v77, 0.0
  %v99 = vrot.slane %v98, 4
  %v100 = vadd.f32 %v98, %v99
  %v101 = vrot.slane %v100, 2
  %v102 = vadd.f32 %v100, %v101
  %v103 = vrot.slane %v102, 1
  %v104 = vadd.f32 %v102, %v103
  %v105 = vsel %vm83, %v78, 0.0
  %v106 = vrot.slane %v105, 4
  %v107 = vadd.f32 %v105, %v106
  %v108 = vrot.slane %v107, 2
  %v109 = vadd.f32 %v107, %v108
  %v110 = vrot.slane %v109, 1
  %v111 = vadd.f32 %v109, %v110
  %v112 = vsel %vm83, %v79, 0.0
  %v113 = vrot.slane %v112, 4
  %v114 = vadd.f32 %v112, %v113
  %v115 = vrot.slane %v114, 2
  %v116 = vadd.f32 %v114, %v115
  %v117 = vrot.slane %v116, 1
  %v118 = vadd.f32 %v116, %v117
  %v119 = vsel %vm83, %v80, 0.0
  %v120 = vrot.slane %v119, 4
  %v121 = vadd.f32 %v119, %v120
  %v122 = vrot.slane %v121, 2
  %v123 = vadd.f32 %v121, %v122
  %v124 = vrot.slane %v123, 1
  %v125 = vadd.f32 %v123, %v124
  %v126 = vsel %vm83, %v81, 0.0
  %v127 = vrot.slane %v126, 4
  %v128 = vadd.f32 %v126, %v127
  %v129 = vrot.slane %v128, 2
  %v130 = vadd.f32 %v128, %v129
  %v131 = vrot.slane %v130, 1
  %v132 = vadd.f32 %v130, %v131
  %v133 = vsel %vm83, %v82, 0.0
  %v134 = vrot.slane %v133, 4
  %v135 = vadd.f32 %v133, %v134
  %v136 = vrot.slane %v135, 2
  %v137 = vadd.f32 %v135, %v136
  %v138 = vrot.slane %v137, 1
  %v139 = vadd.f32 %v137, %v138
  %vm140 = vcmask 7168
  %v141 = vsel %vm140, %v27, 0.0
  %v142 = vrot.slane %v141, 4
  %v143 = vadd.f32 %v141, %v142
  %v144 = vrot.slane %v143, 2
  %v145 = vadd.f32 %v143, %v144
  %v146 = vrot.slane %v145, 1
  %v147 = vadd.f32 %v145, %v146
  %v148 = vsel %vm140, %v28, 0.0
  %v149 = vrot.slane %v148, 4
  %v150 = vadd.f32 %v148, %v149
  %v151 = vrot.slane %v150, 2
  %v152 = vadd.f32 %v150, %v151
  %v153 = vrot.slane %v152, 1
  %v154 = vadd.f32 %v152, %v153
  %v155 = vsel %vm140, %v29, 0.0
  %v156 = vrot.slane %v155, 4
  %v157 = vadd.f32 %v155, %v156
  %v158 = vrot.slane %v157, 2
  %v159 = vadd.f32 %v157, %v158
  %v160 = vrot.slane %v159, 1
  %v161 = vadd.f32 %v159, %v160
  %v162 = vsel %vm140, %v30, 0.0
  %v163 = vrot.slane %v162, 4
  %v164 = vadd.f32 %v162, %v163
  %v165 = vrot.slane %v164, 2
  %v166 = vadd.f32 %v164, %v165
  %v167 = vrot.slane %v166, 1
  %v168 = vadd.f32 %v166, %v167
  %v169 = vsel %vm140, %v31, 0.0
  %v170 = vrot.slane %v169, 4
  %v171 = vadd.f32 %v169, %v170
  %v172 = vrot.slane %v171, 2
  %v173 = vadd.f32 %v171, %v172
  %v174 = vrot.slane %v173, 1
  %v175 = vadd.f32 %v173, %v174
  %v176 = vsel %vm140, %v32, 0.0
  %v177 = vrot.slane %v176, 4
  %v178 = vadd.f32 %v176, %v177
  %v179 = vrot.slane %v178, 2
  %v180 = vadd.f32 %v178, %v179
  %v181 = vrot.slane %v180, 1
  %v182 = vadd.f32 %v180, %v181
  %v183 = vsel %vm140, %v33, 0.0
  %v184 = vrot.slane %v183, 4
  %v185 = vadd.f32 %v183, %v184
  %v186 = vrot.slane %v185, 2
  %v187 = vadd.f32 %v185, %v186
  %v188 = vrot.slane %v187, 1
  %v189 = vadd.f32 %v187, %v188
  %v190 = vsel %vm140, %v34, 0.0
  %v191 = vrot.slane %v190, 4
  %v192 = vadd.f32 %v190, %v191
  %v193 = vrot.slane %v192, 2
  %v194 = vadd.f32 %v192, %v193
  %v195 = vrot.slane %v194, 1
  %v196 = vadd.f32 %v194, %v195
  %v197 = vmax.f32 %v147, 1.0
  %v198 = vmax.f32 %v154, 1.0
  %v199 = vmax.f32 %v161, 1.0
  %v200 = vmax.f32 %v168, 1.0
  %v201 = vmax.f32 %v175, 1.0
  %v202 = vmax.f32 %v182, 1.0
  %v203 = vmax.f32 %v189, 1.0
  %v204 = vmax.f32 %v196, 1.0
  %206 = vset.pattern.permute.xlu0 0
  %207 = vperm.xlu0 %206, %v197
  %v208 = vpop.permute.xlu0 %207
  %211 = vset.pattern.permute.xlu0 0
  %212 = vperm.xlu0 %211, %v198
  %v213 = vpop.permute.xlu0 %212
  %216 = vset.pattern.permute.xlu0 0
  %217 = vperm.xlu0 %216, %v199
  %v218 = vpop.permute.xlu0 %217
  %221 = vset.pattern.permute.xlu0 0
  %222 = vperm.xlu0 %221, %v200
  %v223 = vpop.permute.xlu0 %222
  %226 = vset.pattern.permute.xlu0 0
  %227 = vperm.xlu0 %226, %v201
  %v228 = vpop.permute.xlu0 %227
  %231 = vset.pattern.permute.xlu0 0
  %232 = vperm.xlu0 %231, %v202
  %v233 = vpop.permute.xlu0 %232
  %236 = vset.pattern.permute.xlu0 0
  %237 = vperm.xlu0 %236, %v203
  %v238 = vpop.permute.xlu0 %237
  %241 = vset.pattern.permute.xlu0 0
  %242 = vperm.xlu0 %241, %v204
  %v243 = vpop.permute.xlu0 %242
  %v245 = vrcp.pop %v208
  %v246 = vmul.f32 %v208, %v245
  %v247 = vsub.f32 1.0, %v246
  %v248 = vmul.f32 %v245, %v247
  %v249 = vadd.f32 %v245, %v248
  %vm250 = vweird.f32 %v208
  %vm251 = vweird.f32 %v245
  %vm252 = vmor %vm250, %vm251
  %v253 = vsel %vm252, %v245, %v249
  %v254 = vand.u32 2147483647, %v208
  %vm255 = vcmp.eq.f32.partialorder %v254, 8.507059e+37
  %v256 = vand.u32 %v208, 2147483648
  %v257 = vor.u32 1.1754944e-38, %v256
  %v258 = vsel %vm255, %v257, %v253
  %v259 = vmul.f32 %v90, %v258
  %v260 = vrcp.pop %v213
  %v261 = vmul.f32 %v213, %v260
  %v262 = vsub.f32 1.0, %v261
  %v263 = vmul.f32 %v260, %v262
  %v264 = vadd.f32 %v260, %v263
  %vm265 = vweird.f32 %v213
  %vm266 = vweird.f32 %v260
  %vm267 = vmor %vm265, %vm266
  %v268 = vsel %vm267, %v260, %v264
  %v269 = vand.u32 2147483647, %v213
  %vm270 = vcmp.eq.f32.partialorder %v269, 8.507059e+37
  %v271 = vand.u32 %v213, 2147483648
  %v272 = vor.u32 1.1754944e-38, %v271
  %v273 = vsel %vm270, %v272, %v268
  %v274 = vmul.f32 %v97, %v273
  %v275 = vrcp.pop %v218
  %v276 = vmul.f32 %v218, %v275
  %v277 = vsub.f32 1.0, %v276
  %v278 = vmul.f32 %v275, %v277
  %v279 = vadd.f32 %v275, %v278
  %vm280 = vweird.f32 %v218
  %vm281 = vweird.f32 %v275
  %vm282 = vmor %vm280, %vm281
  %v283 = vsel %vm282, %v275, %v279
  %v284 = vand.u32 2147483647, %v218
  %vm285 = vcmp.eq.f32.partialorder %v284, 8.507059e+37
  %v286 = vand.u32 %v218, 2147483648
  %v287 = vor.u32 1.1754944e-38, %v286
  %v288 = vsel %vm285, %v287, %v283
  %v289 = vmul.f32 %v104, %v288
  %v290 = vrcp.pop %v223
  %v291 = vmul.f32 %v223, %v290
  %v292 = vsub.f32 1.0, %v291
  %v293 = vmul.f32 %v290, %v292
  %v294 = vadd.f32 %v290, %v293
  %vm295 = vweird.f32 %v223
  %vm296 = vweird.f32 %v290
  %vm297 = vmor %vm295, %vm296
  %v298 = vsel %vm297, %v290, %v294
  %v299 = vand.u32 2147483647, %v223
  %vm300 = vcmp.eq.f32.partialorder %v299, 8.507059e+37
  %v301 = vand.u32 %v223, 2147483648
  %v302 = vor.u32 1.1754944e-38, %v301
  %v303 = vsel %vm300, %v302, %v298
  %v304 = vmul.f32 %v111, %v303
  %v305 = vrcp.pop %v228
  %v306 = vmul.f32 %v228, %v305
  %v307 = vsub.f32 1.0, %v306
  %v308 = vmul.f32 %v305, %v307
  %v309 = vadd.f32 %v305, %v308
  %vm310 = vweird.f32 %v228
  %vm311 = vweird.f32 %v305
  %vm312 = vmor %vm310, %vm311
  %v313 = vsel %vm312, %v305, %v309
  %v314 = vand.u32 2147483647, %v228
  %vm315 = vcmp.eq.f32.partialorder %v314, 8.507059e+37
  %v316 = vand.u32 %v228, 2147483648
  %v317 = vor.u32 1.1754944e-38, %v316
  %v318 = vsel %vm315, %v317, %v313
  %v319 = vmul.f32 %v118, %v318
  %v320 = vrcp.pop %v233
  %v321 = vmul.f32 %v233, %v320
  %v322 = vsub.f32 1.0, %v321
  %v323 = vmul.f32 %v320, %v322
  %v324 = vadd.f32 %v320, %v323
  %vm325 = vweird.f32 %v233
  %vm326 = vweird.f32 %v320
  %vm327 = vmor %vm325, %vm326
  %v328 = vsel %vm327, %v320, %v324
  %v329 = vand.u32 2147483647, %v233
  %vm330 = vcmp.eq.f32.partialorder %v329, 8.507059e+37
  %v331 = vand.u32 %v233, 2147483648
  %v332 = vor.u32 1.1754944e-38, %v331
  %v333 = vsel %vm330, %v332, %v328
  %v334 = vmul.f32 %v125, %v333
  %v335 = vrcp.pop %v238
  %v336 = vmul.f32 %v238, %v335
  %v337 = vsub.f32 1.0, %v336
  %v338 = vmul.f32 %v335, %v337
  %v339 = vadd.f32 %v335, %v338
  %vm340 = vweird.f32 %v238
  %vm341 = vweird.f32 %v335
  %vm342 = vmor %vm340, %vm341
  %v343 = vsel %vm342, %v335, %v339
  %v344 = vand.u32 2147483647, %v238
  %vm345 = vcmp.eq.f32.partialorder %v344, 8.507059e+37
  %v346 = vand.u32 %v238, 2147483648
  %v347 = vor.u32 1.1754944e-38, %v346
  %v348 = vsel %vm345, %v347, %v343
  %v349 = vmul.f32 %v132, %v348
  %v350 = vrcp.pop %v243
  %v351 = vmul.f32 %v243, %v350
  %v352 = vsub.f32 1.0, %v351
  %v353 = vmul.f32 %v350, %v352
  %v354 = vadd.f32 %v350, %v353
  %vm355 = vweird.f32 %v243
  %vm356 = vweird.f32 %v350
  %vm357 = vmor %vm355, %vm356
  %v358 = vsel %vm357, %v350, %v354
  %v359 = vand.u32 2147483647, %v243
  %vm360 = vcmp.eq.f32.partialorder %v359, 8.507059e+37
  %v361 = vand.u32 %v243, 2147483648
  %v362 = vor.u32 1.1754944e-38, %v361
  %v363 = vsel %vm360, %v362, %v358
  %v364 = vmul.f32 %v139, %v363
  %vm373 = vcmask 1041409
  %v374 = vsel %vm373, %v274, %v259
  %vm375 = vcmask 1042434
  %v376 = vsel %vm375, %v289, %v374
  %vm377 = vcmask 1043459
  %v378 = vsel %vm377, %v304, %v376
  %vm379 = vcmask 1044484
  %v380 = vsel %vm379, %v319, %v378
  %vm381 = vcmask 1045509
  %v382 = vsel %vm381, %v334, %v380
  %vm383 = vcmask 1046534
  %v384 = vsel %vm383, %v349, %v382
  %vm385 = vcmask 1047559
  %v386 = vsel %vm385, %v364, %v384
  %388 = vst.msk [vmem:[%s2] sm:$0xff] %vm83, %v386
  // Predicated region
  $region10: #{transformer_encoder.9} parent=0 // pred_check
    _
  $region11: #{transformer_encoder.9} parent=0 // pred_check_branch
    %390 = sbr.rel (0) target = $region13
  $region12: #{transformer_encoder.9} parent=0 // pred_region
    _
  $region13: #{transformer_encoder.9} parent=0 // pred_fallthru
    _
  // Predicated region
  $region14: #{transformer_encoder.9} parent=0 // pred_check
    _
  $region15: #{transformer_encoder.9} parent=0 // pred_check_branch
    %392 = sbr.rel (0) target = $region17
  $region16: #{transformer_encoder.9} parent=0 // pred_region
    _
  $region17: #{transformer_encoder.9} parent=0 // pred_fallthru
    _

// kernel: transformer_encoder.6
$region0: #{transformer_encoder.6}
  #allocation0 [shape = 'u32[]', space=smem, size = 0x4, offset = 0x4, fixed_abs, tag = 'smem constant byte address 0x4 - core index']
  #allocation1 [shape = 'u32[72,128]{1,0:T(1,128)}', space=vmem, size = 0x9000, scoped, tag = 'internal scratch']
  %s0 = inlined_call_operand.vmem [shape: bf16[64,32], index: 0, kind: input, shape index: {}]
  %s1 = inlined_call_operand.vmem [shape: bf16[32,64], index: 1, kind: input, shape index: {}]
  %s2 = inlined_call_operand.vmem [shape: f32[1,64], index: 2, kind: input, shape index: {}]
  %s3 = inlined_call_operand.vmem [shape: bf16[64,32], index: 3, kind: input, shape index: {}]
  %s4 = inlined_call_operand.vmem [shape: f32[1,32], index: 4, kind: input, shape index: {}]
  %s5 = inlined_call_operand.vmem [shape: f32[1,32], index: 5, kind: input, shape index: {}]
  %s6 = inlined_call_operand.vmem [shape: f32[1,32], index: 6, kind: input, shape index: {}]
  %s7 = inlined_call_operand.vmem [shape: f32[64,1], index: 7, kind: input, shape index: {}]
  %s8 = inlined_call_operand.vmem [shape: bf16[64,32], index: 8, kind: output, shape index: {}]
  %s9 = sld [smem:[#allocation0]]
  $region42: #{transformer_encoder.6} parent=0
    _
  %s11 = ssub.s32 1, %s9
  %s12 = scalar_select 0, %s11, %s9
  // Predicated region
  $region2: #{transformer_encoder.6} parent=0 // pred_check
    _
  $region3: #{transformer_encoder.6} parent=0 // pred_check_branch
    %14 = sbr.rel (0) target = $region5
  $region4: #{transformer_encoder.6} parent=0 // pred_region
    _
  $region5: #{transformer_encoder.6} parent=0 // pred_fallthru
    _
  // Predicated region
  $region6: #{transformer_encoder.6} parent=0 // pred_check
    _
  $region7: #{transformer_encoder.6} parent=0 // pred_check_branch
    %16 = sbr.rel (0) target = $region9
  $region8: #{transformer_encoder.6} parent=0 // pred_region
    _
  $region9: #{transformer_encoder.6} parent=0 // pred_fallthru
    _
  // Predicated region
  $region10: #{transformer_encoder.6} parent=0 // pred_check
    _
  $region11: #{transformer_encoder.6} parent=0 // pred_check_branch
    %18 = sbr.rel (0) target = $region13
  $region12: #{transformer_encoder.6} parent=0 // pred_region
    _
  $region13: #{transformer_encoder.6} parent=0 // pred_fallthru
    _
  // Predicated region
  $region14: #{transformer_encoder.6} parent=0 // pred_check
    _
  $region15: #{transformer_encoder.6} parent=0 // pred_check_branch
    %20 = sbr.rel (0) target = $region17
  $region16: #{transformer_encoder.6} parent=0 // pred_region
    _
  $region17: #{transformer_encoder.6} parent=0 // pred_fallthru
    _
  // Predicated region
  $region18: #{transformer_encoder.6} parent=0 // pred_check
    _
  $region19: #{transformer_encoder.6} parent=0 // pred_check_branch
    %22 = sbr.rel (0) target = $region21
  $region20: #{transformer_encoder.6} parent=0 // pred_region
    _
  $region21: #{transformer_encoder.6} parent=0 // pred_fallthru
    _
  // Predicated region
  $region22: #{transformer_encoder.6} parent=0 // pred_check
    _
  $region23: #{transformer_encoder.6} parent=0 // pred_check_branch
    %24 = sbr.rel (0) target = $region25
  $region24: #{transformer_encoder.6} parent=0 // pred_region
    _
  $region25: #{transformer_encoder.6} parent=0 // pred_fallthru
    _
  // Predicated region
  $region26: #{transformer_encoder.6} parent=0 // pred_check
    _
  $region27: #{transformer_encoder.6} parent=0 // pred_check_branch
    %26 = sbr.rel (0) target = $region29
  $region28: #{transformer_encoder.6} parent=0 // pred_region
    _
  $region29: #{transformer_encoder.6} parent=0 // pred_fallthru
    _
  // Predicated region
  $region30: #{transformer_encoder.6} parent=0 // pred_check
    _
  $region31: #{transformer_encoder.6} parent=0 // pred_check_branch
    %28 = sbr.rel (0) target = $region33
  $region32: #{transformer_encoder.6} parent=0 // pred_region
    _
  $region33: #{transformer_encoder.6} parent=0 // pred_fallthru
    _
  %v30 = vld [vmem:[%s0] sm:$0xf]
  %v31 = vld [vmem:[%s0 + $0x4] sm:$0xf]
  %v32 = vld [vmem:[%s0 + $0x8] sm:$0xf]
  %v33 = vld [vmem:[%s0 + $0xc] sm:$0xf]
  %v34 = vld [vmem:[%s0 + $0x10] sm:$0xf]
  %v35 = vld [vmem:[%s0 + $0x14] sm:$0xf]
  %v36 = vld [vmem:[%s0 + $0x18] sm:$0xf]
  %v37 = vld [vmem:[%s0 + $0x1c] sm:$0xf]
  %v38 = vld [vmem:[%s1] sm:$0xf]
  %v39 = vld [vmem:[%s1 + $0x4] sm:$0xf]
  %v40 = vld [vmem:[%s1 + $0x8] sm:$0xf]
  %v41 = vld [vmem:[%s1 + $0xc] sm:$0xf]
  %v42 = vld [vmem:[%s2] sm:$0x1]
  %v44 = vperm.slane %v42, 0
  %v54 = vunpack.c.l.b16 %v30
  %v55 = vunpack.c.l.b16 %v31
  %v56 = vunpack.c.l.b16 %v32
  %v57 = vunpack.c.l.b16 %v33
  %v58 = vunpack.c.l.b16 %v34
  %v59 = vunpack.c.l.b16 %v35
  %v60 = vunpack.c.l.b16 %v36
  %v61 = vunpack.c.l.b16 %v37
  %v62 = vpack.c.b16 %v55, %v54
  %v63 = vpack.c.b16 %v57, %v56
  %v64 = vpack.c.b16 %v59, %v58
  %v65 = vpack.c.b16 %v61, %v60
  %v70 = vunpack.c.l.b16 %v38
  %v71 = vunpack.c.l.b16 %v39
  %v72 = vunpack.c.l.b16 %v40
  %v73 = vunpack.c.l.b16 %v41
  %v74 = vpack.c.b16 %v71, %v70
  %v75 = vpack.c.b16 %v73, %v72
  %vm78 = vcmask 261120
  %v80 = vsel %vm78, %v62, 0
  %v83 = vsel %vm78, %v63, 0
  %v86 = vsel %vm78, %v64, 0
  %v89 = vsel %vm78, %v65, 0
  %91 = vmatpush.bf16.msra.mxu0 0
  %92 = vmatpush.bf16.msra.mxu0 0
  %93 = vmatpush.bf16.msra.mxu0 0
  %94 = vmatpush.bf16.msra.mxu0 0
  %95 = vmatpush.bf16.msra.mxu0 0
  %96 = vmatpush.bf16.msra.mxu0 0
  %97 = vmatpush.bf16.msra.mxu0 %v75
  %98 = vmatpush.bf16.msra.mxu0 %v74
  %99 = vmatmul.bf16.gmra.mxu0 %v80
  %v100 = vpop.f32.mrf.mxu0
  %v101 = vadd.f32 %v44, %v100
  %v102 = vpop.f32.mrf.mxu0
  %v103 = vadd.f32 %v44, %v102
  %104 = vmatmul.bf16.gmra.mxu0 %v83
  %v105 = vpop.f32.mrf.mxu0
  %v106 = vadd.f32 %v44, %v105
  %v107 = vpop.f32.mrf.mxu0
  %v108 = vadd.f32 %v44, %v107
  %109 = vmatmul.bf16.gmra.mxu0 %v86
  %v110 = vpop.f32.mrf.mxu0
  %v111 = vadd.f32 %v44, %v110
  %v112 = vpop.f32.mrf.mxu0
  %v113 = vadd.f32 %v44, %v112
  %114 = vmatmul.bf16.gmra.mxu0 %v89
  %v115 = vpop.f32.mrf.mxu0
  %v116 = vadd.f32 %v44, %v115
  %v117 = vpop.f32.mrf.mxu0
  %v118 = vadd.f32 %v44, %v117
  %119 = vdwg.mxu0
  %v120 = vmax.f32 %v101, 0.0
  %v121 = vmax.f32 %v103, 0.0
  %v122 = vmax.f32 %v106, 0.0
  %v123 = vmax.f32 %v108, 0.0
  %v124 = vmax.f32 %v111, 0.0
  %v125 = vmax.f32 %v113, 0.0
  %v126 = vmax.f32 %v116, 0.0
  %v127 = vmax.f32 %v118, 0.0
  %v128 = vpack.c.bf16 %v121, %v120
  %v129 = vpack.c.bf16 %v123, %v122
  %v130 = vpack.c.bf16 %v125, %v124
  %v131 = vpack.c.bf16 %v127, %v126
  %v132 = vld [vmem:[%s3] sm:$0xf]
  %v133 = vld [vmem:[%s3 + $0x4] sm:$0xf]
  %v134 = vld [vmem:[%s3 + $0x8] sm:$0xf]
  %v135 = vld [vmem:[%s3 + $0xc] sm:$0xf]
  %v136 = vld [vmem:[%s3 + $0x10] sm:$0xf]
  %v137 = vld [vmem:[%s3 + $0x14] sm:$0xf]
  %v138 = vld [vmem:[%s3 + $0x18] sm:$0xf]
  %v139 = vld [vmem:[%s3 + $0x1c] sm:$0xf]
  %v140 = vld [vmem:[%s4] sm:$0x1]
  %v142 = vperm.slane %v140, 0
  %v152 = vunpack.c.l.b16 %v132
  %v153 = vunpack.c.l.b16 %v133
  %v154 = vunpack.c.l.b16 %v134
  %v155 = vunpack.c.l.b16 %v135
  %v156 = vunpack.c.l.b16 %v136
  %v157 = vunpack.c.l.b16 %v137
  %v158 = vunpack.c.l.b16 %v138
  %v159 = vunpack.c.l.b16 %v139
  %v160 = vpack.c.b16 %v153, %v152
  %v161 = vpack.c.b16 %v155, %v154
  %v162 = vpack.c.b16 %v157, %v156
  %v163 = vpack.c.b16 %v159, %v158
  %vm168 = vcmask 523264
  %v170 = vsel %vm168, %v128, 0
  %v173 = vsel %vm168, %v129, 0
  %v176 = vsel %vm168, %v130, 0
  %v179 = vsel %vm168, %v131, 0
  %181 = vmatpush.bf16.msra.mxu0 0
  %182 = vmatpush.bf16.msra.mxu0 0
  %183 = vmatpush.bf16.msra.mxu0 0
  %184 = vmatpush.bf16.msra.mxu0 0
  %185 = vmatpush.bf16.msra.mxu0 %v163
  %186 = vmatpush.bf16.msra.mxu0 %v162
  %187 = vmatpush.bf16.msra.mxu0 %v161
  %188 = vmatpush.bf16.msra.mxu0 %v160
  %189 = vmatmul.bf16.gmra.mxu0 %v170
  %v190 = vpop.f32.mrf.mxu0
  %v191 = vadd.f32 %v142, %v190
  %v192 = vpop.f32.mrf.mxu0
  %v193 = vadd.f32 %v142, %v192
  %194 = vmatmul.bf16.gmra.mxu0 %v173
  %v195 = vpop.f32.mrf.mxu0
  %v196 = vadd.f32 %v142, %v195
  %v197 = vpop.f32.mrf.mxu0
  %v198 = vadd.f32 %v142, %v197
  %199 = vmatmul.bf16.gmra.mxu0 %v176
  %v200 = vpop.f32.mrf.mxu0
  %v201 = vadd.f32 %v142, %v200
  %v202 = vpop.f32.mrf.mxu0
  %v203 = vadd.f32 %v142, %v202
  %204 = vmatmul.bf16.gmra.mxu0 %v179
  %v205 = vpop.f32.mrf.mxu0
  %v206 = vadd.f32 %v142, %v205
  %v207 = vpop.f32.mrf.mxu0
  %v208 = vadd.f32 %v142, %v207
  %209 = vdwg.mxu0
  %v210 = vunpack.c.l.bf16 %v30
  %v211 = vunpack.c.l.bf16 %v31
  %v212 = vunpack.c.l.bf16 %v32
  %v213 = vunpack.c.l.bf16 %v33
  %v214 = vunpack.c.l.bf16 %v34
  %v215 = vunpack.c.l.bf16 %v35
  %v216 = vunpack.c.l.bf16 %v36
  %v217 = vunpack.c.l.bf16 %v37
  %v218 = vadd.f32 %v191, %v210
  %v219 = vadd.f32 %v193, %v211
  %v220 = vadd.f32 %v196, %v212
  %v221 = vadd.f32 %v198, %v213
  %v222 = vadd.f32 %v201, %v214
  %v223 = vadd.f32 %v203, %v215
  %v224 = vadd.f32 %v206, %v216
  %v225 = vadd.f32 %v208, %v217
  %v226 = vld [vmem:[%s5] sm:$0x1]
  %v227 = vld [vmem:[%s6] sm:$0x1]
  %v228 = vsel %vm78, %v218, 0.0
  %229 = vadd.xlane.f32.xlu0 %v228
  %v230 = vpop.xlane.xlu0 %229
  %v231 = vsel %vm78, %v219, 0.0
  %232 = vadd.xlane.f32.xlu0 %v231
  %v233 = vpop.xlane.xlu0 %232
  %v234 = vsel %vm78, %v220, 0.0
  %235 = vadd.xlane.f32.xlu0 %v234
  %v236 = vpop.xlane.xlu0 %235
  %v237 = vsel %vm78, %v221, 0.0
  %238 = vadd.xlane.f32.xlu0 %v237
  %v239 = vpop.xlane.xlu0 %238
  %v240 = vsel %vm78, %v222, 0.0
  %241 = vadd.xlane.f32.xlu0 %v240
  %v242 = vpop.xlane.xlu0 %241
  %v243 = vsel %vm78, %v223, 0.0
  %244 = vadd.xlane.f32.xlu0 %v243
  %v245 = vpop.xlane.xlu0 %244
  %v246 = vsel %vm78, %v224, 0.0
  %247 = vadd.xlane.f32.xlu0 %v246
  %v248 = vpop.xlane.xlu0 %247
  %v249 = vsel %vm78, %v225, 0.0
  %250 = vadd.xlane.f32.xlu0 %v249
  %v251 = vpop.xlane.xlu0 %250
  %v252 = vrcp.pop 32.0
  %v253 = vmul.f32 32.0, %v252
  %v254 = vsub.f32 1.0, %v253
  %v255 = vmul.f32 %v252, %v254
  %v256 = vadd.f32 %v252, %v255
  %vm257 = vweird.f32 %v252
  %v258 = vsel %vm257, %v252, %v256
  %v259 = vmul.f32 %v230, %v258
  %v260 = vmul.f32 %v233, %v258
  %v261 = vmul.f32 %v236, %v258
  %v262 = vmul.f32 %v239, %v258
  %v263 = vmul.f32 %v242, %v258
  %v264 = vmul.f32 %v245, %v258
  %v265 = vmul.f32 %v248, %v258
  %v266 = vmul.f32 %v251, %v258
  %v267 = vsub.f32 %v218, %v259
  %v268 = vsub.f32 %v219, %v260
  %v269 = vsub.f32 %v220, %v261
  %v270 = vsub.f32 %v221, %v262
  %v271 = vsub.f32 %v222, %v263
  %v272 = vsub.f32 %v223, %v264
  %v273 = vsub.f32 %v224, %v265
  %v274 = vsub.f32 %v225, %v266
  %v275 = vmul.f32 %v267, %v267
  %v276 = vmul.f32 %v268, %v268
  %v277 = vmul.f32 %v269, %v269
  %v278 = vmul.f32 %v270, %v270
  %v279 = vmul.f32 %v271, %v271
  %v280 = vmul.f32 %v272, %v272
  %v281 = vmul.f32 %v273, %v273
  %v282 = vmul.f32 %v274, %v274
  %v283 = vsel %vm78, %v275, 0.0
  %284 = vadd.xlane.f32.xlu0 %v283
  %v285 = vpop.xlane.xlu0 %284
  %v286 = vsel %vm78, %v276, 0.0
  %287 = vadd.xlane.f32.xlu0 %v286
  %v288 = vpop.xlane.xlu0 %287
  %v289 = vsel %vm78, %v277, 0.0
  %290 = vadd.xlane.f32.xlu0 %v289
  %v291 = vpop.xlane.xlu0 %290
  %v292 = vsel %vm78, %v278, 0.0
  %293 = vadd.xlane.f32.xlu0 %v292
  %v294 = vpop.xlane.xlu0 %293
  %v295 = vsel %vm78, %v279, 0.0
  %296 = vadd.xlane.f32.xlu0 %v295
  %v297 = vpop.xlane.xlu0 %296
  %v298 = vsel %vm78, %v280, 0.0
  %299 = vadd.xlane.f32.xlu0 %v298
  %v300 = vpop.xlane.xlu0 %299
  %v301 = vsel %vm78, %v281, 0.0
  %302 = vadd.xlane.f32.xlu0 %v301
  %v303 = vpop.xlane.xlu0 %302
  %v304 = vsel %vm78, %v282, 0.0
  %305 = vadd.xlane.f32.xlu0 %v304
  %v306 = vpop.xlane.xlu0 %305
  %v307 = vmul.f32 %v285, %v258
  %v308 = vmul.f32 %v288, %v258
  %v309 = vmul.f32 %v291, %v258
  %v310 = vmul.f32 %v294, %v258
  %v311 = vmul.f32 %v297, %v258
  %v312 = vmul.f32 %v300, %v258
  %v313 = vmul.f32 %v303, %v258
  %v314 = vmul.f32 %v306, %v258
  %v315 = vadd.f32 %v307, 1e-05
  %v316 = vadd.f32 %v308, 1e-05
  %v317 = vadd.f32 %v309, 1e-05
  %v318 = vadd.f32 %v310, 1e-05
  %v319 = vadd.f32 %v311, 1e-05
  %v320 = vadd.f32 %v312, 1e-05
  %v321 = vadd.f32 %v313, 1e-05
  %v322 = vadd.f32 %v314, 1e-05
  %v323 = vrsqrt.pop %v315
  %v324 = vmul.f32 %v323, %v315
  %v325 = vmul.f32 %v324, %v323
  %v326 = vmul.f32 0.5, %v325
  %v327 = vsub.f32 1.5, %v326
  %v328 = vmul.f32 %v323, %v327
  %vm329 = vweird.f32 %v315
  %vm330 = vweird.f32 %v323
  %vm331 = vmor %vm329, %vm330
  %v332 = vsel %vm331, %v323, %v328
  %v333 = vrsqrt.pop %v316
  %v334 = vmul.f32 %v333, %v316
  %v335 = vmul.f32 %v334, %v333
  %v336 = vmul.f32 0.5, %v335
  %v337 = vsub.f32 1.5, %v336
  %v338 = vmul.f32 %v333, %v337
  %vm339 = vweird.f32 %v316
  %vm340 = vweird.f32 %v333
  %vm341 = vmor %vm339, %vm340
  %v342 = vsel %vm341, %v333, %v338
  %v343 = vrsqrt.pop %v317
  %v344 = vmul.f32 %v343, %v317
  %v345 = vmul.f32 %v344, %v343
  %v346 = vmul.f32 0.5, %v345
  %v347 = vsub.f32 1.5, %v346
  %v348 = vmul.f32 %v343, %v347
  %vm349 = vweird.f32 %v317
  %vm350 = vweird.f32 %v343
  %vm351 = vmor %vm349, %vm350
  %v352 = vsel %vm351, %v343, %v348
  %v353 = vrsqrt.pop %v318
  %v354 = vmul.f32 %v353, %v318
  %v355 = vmul.f32 %v354, %v353
  %v356 = vmul.f32 0.5, %v355
  %v357 = vsub.f32 1.5, %v356
  %v358 = vmul.f32 %v353, %v357
  %vm359 = vweird.f32 %v318
  %vm360 = vweird.f32 %v353
  %vm361 = vmor %vm359, %vm360
  %v362 = vsel %vm361, %v353, %v358
  %v363 = vrsqrt.pop %v319
  %v364 = vmul.f32 %v363, %v319
  %v365 = vmul.f32 %v364, %v363
  %v366 = vmul.f32 0.5, %v365
  %v367 = vsub.f32 1.5, %v366
  %v368 = vmul.f32 %v363, %v367
  %vm369 = vweird.f32 %v319
  %vm370 = vweird.f32 %v363
  %vm371 = vmor %vm369, %vm370
  %v372 = vsel %vm371, %v363, %v368
  %v373 = vrsqrt.pop %v320
  %v374 = vmul.f32 %v373, %v320
  %v375 = vmul.f32 %v374, %v373
  %v376 = vmul.f32 0.5, %v375
  %v377 = vsub.f32 1.5, %v376
  %v378 = vmul.f32 %v373, %v377
  %vm379 = vweird.f32 %v320
  %vm380 = vweird.f32 %v373
  %vm381 = vmor %vm379, %vm380
  %v382 = vsel %vm381, %v373, %v378
  %v383 = vrsqrt.pop %v321
  %v384 = vmul.f32 %v383, %v321
  %v385 = vmul.f32 %v384, %v383
  %v386 = vmul.f32 0.5, %v385
  %v387 = vsub.f32 1.5, %v386
  %v388 = vmul.f32 %v383, %v387
  %vm389 = vweird.f32 %v321
  %vm390 = vweird.f32 %v383
  %vm391 = vmor %vm389, %vm390
  %v392 = vsel %vm391, %v383, %v388
  %v393 = vrsqrt.pop %v322
  %v394 = vmul.f32 %v393, %v322
  %v395 = vmul.f32 %v394, %v393
  %v396 = vmul.f32 0.5, %v395
  %v397 = vsub.f32 1.5, %v396
  %v398 = vmul.f32 %v393, %v397
  %vm399 = vweird.f32 %v322
  %vm400 = vweird.f32 %v393
  %vm401 = vmor %vm399, %vm400
  %v402 = vsel %vm401, %v393, %v398
  %v403 = vmul.f32 %v267, %v332
  %v404 = vmul.f32 %v268, %v342
  %v405 = vmul.f32 %v269, %v352
  %v406 = vmul.f32 %v270, %v362
  %v407 = vmul.f32 %v271, %v372
  %v408 = vmul.f32 %v272, %v382
  %v409 = vmul.f32 %v273, %v392
  %v410 = vmul.f32 %v274, %v402
  %v412 = vperm.slane %v226, 0
  %v414 = vmul.f32 %v403, %v412
  %v415 = vmul.f32 %v404, %v412
  %v416 = vmul.f32 %v405, %v412
  %v417 = vmul.f32 %v406, %v412
  %v418 = vmul.f32 %v407, %v412
  %v419 = vmul.f32 %v408, %v412
  %v420 = vmul.f32 %v409, %v412
  %v421 = vmul.f32 %v410, %v412
  %v423 = vperm.slane %v227, 0
  %v425 = vadd.f32 %v414, %v423
  %v426 = vadd.f32 %v415, %v423
  %v427 = vadd.f32 %v416, %v423
  %v428 = vadd.f32 %v417, %v423
  %v429 = vadd.f32 %v418, %v423
  %v430 = vadd.f32 %v419, %v423
  %v431 = vadd.f32 %v420, %v423
  %v432 = vadd.f32 %v421, %v423
  %v433 = vld [vmem:[%s7] sm:$0xff]
  %v434 = vld [vmem:[%s7 + $0x8] sm:$0xff]
  %v435 = vld [vmem:[%s7 + $0x10] sm:$0xff]
  %v436 = vld [vmem:[%s7 + $0x18] sm:$0xff]
  %v437 = vld [vmem:[%s7 + $0x20] sm:$0xff]
  %v438 = vld [vmem:[%s7 + $0x28] sm:$0xff]
  %v439 = vld [vmem:[%s7 + $0x30] sm:$0xff]
  %v440 = vld [vmem:[%s7 + $0x38] sm:$0xff]
  %442 = vset.pattern.permute.xlu0 0
  %443 = vperm.xlu0 %442, %v433
  %v444 = vpop.permute.xlu0 %443
  %447 = vset.pattern.permute.xlu0 0
  %448 = vperm.xlu0 %447, %v434
  %v449 = vpop.permute.xlu0 %448
  %452 = vset.pattern.permute.xlu0 0
  %453 = vperm.xlu0 %452, %v435
  %v454 = vpop.permute.xlu0 %453
  %457 = vset.pattern.permute.xlu0 0
  %458 = vperm.xlu0 %457, %v436
  %v459 = vpop.permute.xlu0 %458
  %462 = vset.pattern.permute.xlu0 0
  %463 = vperm.xlu0 %462, %v437
  %v464 = vpop.permute.xlu0 %463
  %467 = vset.pattern.permute.xlu0 0
  %468 = vperm.xlu0 %467, %v438
  %v469 = vpop.permute.xlu0 %468
  %472 = vset.pattern.permute.xlu0 0
  %473 = vperm.xlu0 %472, %v439
  %v474 = vpop.permute.xlu0 %473
  %477 = vset.pattern.permute.xlu0 0
  %478 = vperm.xlu0 %477, %v440
  %v479 = vpop.permute.xlu0 %478
  %v481 = vmul.f32 %v425, %v444
  %v482 = vmul.f32 %v426, %v449
  %v483 = vmul.f32 %v427, %v454
  %v484 = vmul.f32 %v428, %v459
  %v485 = vmul.f32 %v429, %v464
  %v486 = vmul.f32 %v430, %v469
  %v487 = vmul.f32 %v431, %v474
  %v488 = vmul.f32 %v432, %v479
  %v489 = vpack.c.bf16 %v481, %v481
  %v490 = vpack.c.bf16 %v482, %v482
  %v491 = vpack.c.bf16 %v483, %v483
  %v492 = vpack.c.bf16 %v484, %v484
  %v493 = vpack.c.bf16 %v485, %v485
  %v494 = vpack.c.bf16 %v486, %v486
  %v495 = vpack.c.bf16 %v487, %v487
  %v496 = vpack.c.bf16 %v488, %v488
  %vm497 = vcmask 257024
  %498 = vst.msk [vmem:[%s8] sm:$0xf] %vm497, %v489
  %499 = vst.msk [vmem:[%s8 + $0x4] sm:$0xf] %vm497, %v490
  %500 = vst.msk [vmem:[%s8 + $0x8] sm:$0xf] %vm497, %v491
  %501 = vst.msk [vmem:[%s8 + $0xc] sm:$0xf] %vm497, %v492
  %502 = vst.msk [vmem:[%s8 + $0x10] sm:$0xf] %vm497, %v493
  %503 = vst.msk [vmem:[%s8 + $0x14] sm:$0xf] %vm497, %v494
  %504 = vst.msk [vmem:[%s8 + $0x18] sm:$0xf] %vm497, %v495
  %505 = vst.msk [vmem:[%s8 + $0x1c] sm:$0xf] %vm497, %v496
  // Predicated region
  $region34: #{transformer_encoder.6} parent=0 // pred_check
    _
  $region35: #{transformer_encoder.6} parent=0 // pred_check_branch
    %507 = sbr.rel (0) target = $region37
  $region36: #{transformer_encoder.6} parent=0 // pred_region
    _
  $region37: #{transformer_encoder.6} parent=0 // pred_fallthru
    _
  // Predicated region
  $region38: #{transformer_encoder.6} parent=0 // pred_check
    _
  $region39: #{transformer_encoder.6} parent=0 // pred_check_branch
    %509 = sbr.rel (0) target = $region41
  $region40: #{transformer_encoder.6} parent=0 // pred_region
    _
  $region41: #{transformer_encoder.6} parent=0 // pred_fallthru
    _

// kernel: transformer_encoder.5
$region0: #{transformer_encoder.5}
  #allocation0 [shape = 'u32[]', space=smem, size = 0x4, offset = 0x4, fixed_abs, tag = 'smem constant byte address 0x4 - core index']
  #allocation1 [shape = 'u32[72,128]{1,0:T(1,128)}', space=vmem, size = 0x9000, scoped, tag = 'internal scratch']
  %s0 = inlined_call_operand.vmem [shape: bf16[8,8,32], index: 0, kind: input, shape index: {}]
  %s1 = inlined_call_operand.vmem [shape: f32[8,1,8], index: 1, kind: input, shape index: {}]
  %s2 = inlined_call_operand.vmem [shape: bf16[2,32,16], index: 2, kind: input, shape index: {}]
  %s3 = inlined_call_operand.vmem [shape: bf16[2,32,16], index: 3, kind: input, shape index: {}]
  %s4 = inlined_call_operand.vmem [shape: bf16[2,32,16], index: 4, kind: input, shape index: {}]
  %s5 = inlined_call_operand.vmem [shape: f32[2,1,16], index: 5, kind: input, shape index: {}]
  %s6 = inlined_call_operand.vmem [shape: f32[2,1,16], index: 6, kind: input, shape index: {}]
  %s7 = inlined_call_operand.vmem [shape: f32[2,1,16], index: 7, kind: input, shape index: {}]
  %s8 = inlined_call_operand.vmem [shape: bf16[2,16,32], index: 8, kind: input, shape index: {}]
  %s9 = inlined_call_operand.vmem [shape: f32[1,32], index: 9, kind: input, shape index: {}]
  %s10 = inlined_call_operand.vmem [shape: f32[1,32], index: 10, kind: input, shape index: {}]
  %s11 = inlined_call_operand.vmem [shape: f32[1,32], index: 11, kind: input, shape index: {}]
  %s12 = inlined_call_operand.vmem [shape: bf16[8,8,32], index: 12, kind: output, shape index: {}]
  %s13 = sld [smem:[#allocation0]]
  $region81: #{transformer_encoder.5} parent=0
    _
  %s15 = ssub.s32 1, %s13
  %s16 = scalar_select 0, %s15, %s13
  loop: start=0, step=1, limit=10
  $region2: #{transformer_encoder.5} parent=0 // loop_pre_header
    _
  $region3: #{transformer_encoder.5} parent=0 // loop_header
    %s18 = sphi 0, %s22
    %p19 = scmp.ge.s32.totalorder %s18, 10
    %s28 = sphi 0, %s30
    %s31 = sphi 0, %s28
    %s32 = sphi 0, %s31
    %s48 = sphi 0, %s32
    %s54 = sphi 0, %s56
    %s57 = sphi 0, %s54
    %s58 = sphi 0, %s57
    %s74 = sphi 0, %s58
    %s78 = sphi 0, %s78
    %s80 = sphi 0, %s78
    %s81 = sphi 0, %s80
    %s95 = sphi 0, %s81
    %s99 = sphi 0, %s99
    %s101 = sphi 0, %s99
    %s102 = sphi 0, %s101
    %s116 = sphi 0, %s102
    %s120 = sphi 0, %s120
    %s122 = sphi 0, %s120
    %s123 = sphi 0, %s122
    %s137 = sphi 0, %s123
    %s141 = sphi 0, %s141
    %s143 = sphi 0, %s141
    %s144 = sphi 0, %s143
    %s158 = sphi 0, %s144
    %s162 = sphi 0, %s162
    %s164 = sphi 0, %s162
    %s165 = sphi 0, %s164
    %s179 = sphi 0, %s165
    %s183 = sphi 0, %s183
    %s185 = sphi 0, %s183
    %s186 = sphi 0, %s185
    %s200 = sphi 0, %s186
    %s204 = sphi 0, %s204
    %s206 = sphi 0, %s204
    %s207 = sphi 0, %s206
    %s221 = sphi 0, %s207
    %s225 = sphi 0, %s225
    %s227 = sphi 0, %s225
    %s228 = sphi 0, %s227
    %s242 = sphi 0, %s228
    %s246 = sphi 0, %s246
    %s248 = sphi 0, %s246
    %s249 = sphi 0, %s248
    %s263 = sphi 0, %s249
    %s267 = sphi 0, %s267
    %s269 = sphi 0, %s267
    %s270 = sphi 0, %s269
    %s284 = sphi 0, %s270
    %s290 = sphi 0, %s292
    %s293 = sphi 0, %s290
    %s294 = sphi 0, %s293
    %s310 = sphi 0, %s294
  $region4: #{transformer_encoder.5} parent=0 // loop_header_branch
    %21 = sbr.rel (%p19) target = $region8
  $region5: #{transformer_encoder.5} parent=0 // loop_body
    %s23 = ssub.s32 %s18, 1
    %s24 = ssub.s32 %s18, 2
    %s25 = sadd.s32 %s18, 1
    %s26 = ssub.s32 %s18, %s25
    %p27 = scmp.eq.s32.totalorder %s26, 0
    %s29 = sadd.s32 %s28, 1
    %s30 = scalar_select %p27, %s28, %s29
    %p33 = pneg %p27
    %p34 = scmp.eq.s32.totalorder %s18, 7
    %p35 = por %p33, %p34
    %p36 = scmp.ne.s32.totalorder %s28, %s31
    %p37 = scmp.eq.s32.totalorder %s18, 0
    %p38 = por %p36, %p37
    %p39 = scmp.ne.s32.totalorder %s28, %s31
    %p40 = scmp.eq.s32.totalorder %s23, 7
    %p41 = por %p39, %p40
    %p42 = scmp.ne.s32.totalorder %s31, %s32
    %p43 = scmp.eq.s32.totalorder %s23, 0
    %p44 = por %p42, %p43
    %p45 = scmp.ne.s32.totalorder %s31, %s32
    %p46 = scmp.eq.s32.totalorder %s24, 7
    %p47 = por %p45, %p46
    %p49 = scmp.ne.s32.totalorder %s32, %s48
    %p50 = scmp.eq.s32.totalorder %s24, 0
    %p51 = por %p49, %p50
    %s52 = ssub.s32 %s18, %s25
    %p53 = scmp.eq.s32.totalorder %s52, 0
    %s55 = sadd.s32 %s54, 1
    %s56 = scalar_select %p53, %s54, %s55
    %p59 = pneg %p53
    %p60 = scmp.eq.s32.totalorder %s18, 7
    %p61 = por %p59, %p60
    %p62 = scmp.ne.s32.totalorder %s54, %s57
    %p63 = scmp.eq.s32.totalorder %s18, 0
    %p64 = por %p62, %p63
    %p65 = scmp.ne.s32.totalorder %s54, %s57
    %p66 = scmp.eq.s32.totalorder %s23, 7
    %p67 = por %p65, %p66
    %p68 = scmp.ne.s32.totalorder %s57, %s58
    %p69 = scmp.eq.s32.totalorder %s23, 0
    %p70 = por %p68, %p69
    %p71 = scmp.ne.s32.totalorder %s57, %s58
    %p72 = scmp.eq.s32.totalorder %s24, 7
    %p73 = por %p71, %p72
    %p75 = scmp.ne.s32.totalorder %s58, %s74
    %p76 = scmp.eq.s32.totalorder %s24, 0
    %p77 = por %p75, %p76
    %s79 = sadd.s32 %s78, 1
    %p82 = scmp.eq.s32.totalorder %s18, 7
    %p83 = scmp.ne.s32.totalorder %s78, %s80
    %p84 = scmp.eq.s32.totalorder %s18, 0
    %p85 = por %p83, %p84
    %p86 = scmp.ne.s32.totalorder %s78, %s80
    %p87 = scmp.eq.s32.totalorder %s23, 7
    %p88 = por %p86, %p87
    %p89 = scmp.ne.s32.totalorder %s80, %s81
    %p90 = scmp.eq.s32.totalorder %s23, 0
    %p91 = por %p89, %p90
    %p92 = scmp.ne.s32.totalorder %s80, %s81
    %p93 = scmp.eq.s32.totalorder %s24, 7
    %p94 = por %p92, %p93
    %p96 = scmp.ne.s32.totalorder %s81, %s95
    %p97 = scmp.eq.s32.totalorder %s24, 0
    %p98 = por %p96, %p97
    %s100 = sadd.s32 %s99, 1
    %p103 = scmp.eq.s32.totalorder %s18, 7
    %p104 = scmp.ne.s32.totalorder %s99, %s101
    %p105 = scmp.eq.s32.totalorder %s18, 0
    %p106 = por %p104, %p105
    %p107 = scmp.ne.s32.totalorder %s99, %s101
    %p108 = scmp.eq.s32.totalorder %s23, 7
    %p109 = por %p107, %p108
    %p110 = scmp.ne.s32.totalorder %s101, %s102
    %p111 = scmp.eq.s32.totalorder %s23, 0
    %p112 = por %p110, %p111
    %p113 = scmp.ne.s32.totalorder %s101, %s102
    %p114 = scmp.eq.s32.totalorder %s24, 7
    %p115 = por %p113, %p114
    %p117 = scmp.ne.s32.totalorder %s102, %s116
    %p118 = scmp.eq.s32.totalorder %s24, 0
    %p119 = por %p117, %p118
    %s121 = sadd.s32 %s120, 1
    %p124 = scmp.eq.s32.totalorder %s18, 7
    %p125 = scmp.ne.s32.totalorder %s120, %s122
    %p126 = scmp.eq.s32.totalorder %s18, 0
    %p127 = por %p125, %p126
    %p128 = scmp.ne.s32.totalorder %s120, %s122
    %p129 = scmp.eq.s32.totalorder %s23, 7
    %p130 = por %p128, %p129
    %p131 = scmp.ne.s32.totalorder %s122, %s123
    %p132 = scmp.eq.s32.totalorder %s23, 0
    %p133 = por %p131, %p132
    %p134 = scmp.ne.s32.totalorder %s122, %s123
    %p135 = scmp.eq.s32.totalorder %s24, 7
    %p136 = por %p134, %p135
    %p138 = scmp.ne.s32.totalorder %s123, %s137
    %p139 = scmp.eq.s32.totalorder %s24, 0
    %p140 = por %p138, %p139
    %s142 = sadd.s32 %s141, 1
    %p145 = scmp.eq.s32.totalorder %s18, 7
    %p146 = scmp.ne.s32.totalorder %s141, %s143
    %p147 = scmp.eq.s32.totalorder %s18, 0
    %p148 = por %p146, %p147
    %p149 = scmp.ne.s32.totalorder %s141, %s143
    %p150 = scmp.eq.s32.totalorder %s23, 7
    %p151 = por %p149, %p150
    %p152 = scmp.ne.s32.totalorder %s143, %s144
    %p153 = scmp.eq.s32.totalorder %s23, 0
    %p154 = por %p152, %p153
    %p155 = scmp.ne.s32.totalorder %s143, %s144
    %p156 = scmp.eq.s32.totalorder %s24, 7
    %p157 = por %p155, %p156
    %p159 = scmp.ne.s32.totalorder %s144, %s158
    %p160 = scmp.eq.s32.totalorder %s24, 0
    %p161 = por %p159, %p160
    %s163 = sadd.s32 %s162, 1
    %p166 = scmp.eq.s32.totalorder %s18, 7
    %p167 = scmp.ne.s32.totalorder %s162, %s164
    %p168 = scmp.eq.s32.totalorder %s18, 0
    %p169 = por %p167, %p168
    %p170 = scmp.ne.s32.totalorder %s162, %s164
    %p171 = scmp.eq.s32.totalorder %s23, 7
    %p172 = por %p170, %p171
    %p173 = scmp.ne.s32.totalorder %s164, %s165
    %p174 = scmp.eq.s32.totalorder %s23, 0
    %p175 = por %p173, %p174
    %p176 = scmp.ne.s32.totalorder %s164, %s165
    %p177 = scmp.eq.s32.totalorder %s24, 7
    %p178 = por %p176, %p177
    %p180 = scmp.ne.s32.totalorder %s165, %s179
    %p181 = scmp.eq.s32.totalorder %s24, 0
    %p182 = por %p180, %p181
    %s184 = sadd.s32 %s183, 1
    %p187 = scmp.eq.s32.totalorder %s18, 7
    %p188 = scmp.ne.s32.totalorder %s183, %s185
    %p189 = scmp.eq.s32.totalorder %s18, 0
    %p190 = por %p188, %p189
    %p191 = scmp.ne.s32.totalorder %s183, %s185
    %p192 = scmp.eq.s32.totalorder %s23, 7
    %p193 = por %p191, %p192
    %p194 = scmp.ne.s32.totalorder %s185, %s186
    %p195 = scmp.eq.s32.totalorder %s23, 0
    %p196 = por %p194, %p195
    %p197 = scmp.ne.s32.totalorder %s185, %s186
    %p198 = scmp.eq.s32.totalorder %s24, 7
    %p199 = por %p197, %p198
    %p201 = scmp.ne.s32.totalorder %s186, %s200
    %p202 = scmp.eq.s32.totalorder %s24, 0
    %p203 = por %p201, %p202
    %s205 = sadd.s32 %s204, 1
    %p208 = scmp.eq.s32.totalorder %s18, 7
    %p209 = scmp.ne.s32.totalorder %s204, %s206
    %p210 = scmp.eq.s32.totalorder %s18, 0
    %p211 = por %p209, %p210
    %p212 = scmp.ne.s32.totalorder %s204, %s206
    %p213 = scmp.eq.s32.totalorder %s23, 7
    %p214 = por %p212, %p213
    %p215 = scmp.ne.s32.totalorder %s206, %s207
    %p216 = scmp.eq.s32.totalorder %s23, 0
    %p217 = por %p215, %p216
    %p218 = scmp.ne.s32.totalorder %s206, %s207
    %p219 = scmp.eq.s32.totalorder %s24, 7
    %p220 = por %p218, %p219
    %p222 = scmp.ne.s32.totalorder %s207, %s221
    %p223 = scmp.eq.s32.totalorder %s24, 0
    %p224 = por %p222, %p223
    %s226 = sadd.s32 %s225, 1
    %p229 = scmp.eq.s32.totalorder %s18, 7
    %p230 = scmp.ne.s32.totalorder %s225, %s227
    %p231 = scmp.eq.s32.totalorder %s18, 0
    %p232 = por %p230, %p231
    %p233 = scmp.ne.s32.totalorder %s225, %s227
    %p234 = scmp.eq.s32.totalorder %s23, 7
    %p235 = por %p233, %p234
    %p236 = scmp.ne.s32.totalorder %s227, %s228
    %p237 = scmp.eq.s32.totalorder %s23, 0
    %p238 = por %p236, %p237
    %p239 = scmp.ne.s32.totalorder %s227, %s228
    %p240 = scmp.eq.s32.totalorder %s24, 7
    %p241 = por %p239, %p240
    %p243 = scmp.ne.s32.totalorder %s228, %s242
    %p244 = scmp.eq.s32.totalorder %s24, 0
    %p245 = por %p243, %p244
    %s247 = sadd.s32 %s246, 1
    %p250 = scmp.eq.s32.totalorder %s18, 7
    %p251 = scmp.ne.s32.totalorder %s246, %s248
    %p252 = scmp.eq.s32.totalorder %s18, 0
    %p253 = por %p251, %p252
    %p254 = scmp.ne.s32.totalorder %s246, %s248
    %p255 = scmp.eq.s32.totalorder %s23, 7
    %p256 = por %p254, %p255
    %p257 = scmp.ne.s32.totalorder %s248, %s249
    %p258 = scmp.eq.s32.totalorder %s23, 0
    %p259 = por %p257, %p258
    %p260 = scmp.ne.s32.totalorder %s248, %s249
    %p261 = scmp.eq.s32.totalorder %s24, 7
    %p262 = por %p260, %p261
    %p264 = scmp.ne.s32.totalorder %s249, %s263
    %p265 = scmp.eq.s32.totalorder %s24, 0
    %p266 = por %p264, %p265
    %s268 = sadd.s32 %s267, 1
    %p271 = scmp.eq.s32.totalorder %s18, 7
    %p272 = scmp.ne.s32.totalorder %s267, %s269
    %p273 = scmp.eq.s32.totalorder %s18, 0
    %p274 = por %p272, %p273
    %p275 = scmp.ne.s32.totalorder %s267, %s269
    %p276 = scmp.eq.s32.totalorder %s23, 7
    %p277 = por %p275, %p276
    %p278 = scmp.ne.s32.totalorder %s269, %s270
    %p279 = scmp.eq.s32.totalorder %s23, 0
    %p280 = por %p278, %p279
    %p281 = scmp.ne.s32.totalorder %s269, %s270
    %p282 = scmp.eq.s32.totalorder %s24, 7
    %p283 = por %p281, %p282
    %p285 = scmp.ne.s32.totalorder %s270, %s284
    %p286 = scmp.eq.s32.totalorder %s24, 0
    %p287 = por %p285, %p286
    %s288 = ssub.s32 %s18, %s25
    %p289 = scmp.eq.s32.totalorder %s288, 0
    %s291 = sadd.s32 %s290, 1
    %s292 = scalar_select %p289, %s290, %s291
    %p295 = pneg %p289
    %p296 = scmp.eq.s32.totalorder %s18, 7
    %p297 = por %p295, %p296
    %p298 = scmp.ne.s32.totalorder %s290, %s293
    %p299 = scmp.eq.s32.totalorder %s18, 0
    %p300 = por %p298, %p299
    %p301 = scmp.ne.s32.totalorder %s290, %s293
    %p302 = scmp.eq.s32.totalorder %s23, 7
    %p303 = por %p301, %p302
    %p304 = scmp.ne.s32.totalorder %s293, %s294
    %p305 = scmp.eq.s32.totalorder %s23, 0
    %p306 = por %p304, %p305
    %p307 = scmp.ne.s32.totalorder %s293, %s294
    %p308 = scmp.eq.s32.totalorder %s24, 7
    %p309 = por %p307, %p308
    %p311 = scmp.ne.s32.totalorder %s294, %s310
    %p312 = scmp.eq.s32.totalorder %s24, 0
    %p313 = por %p311, %p312
    %p314 = scmp.le.s32.totalorder 1, %s18
    %p315 = scmp.lt.s32.totalorder %s18, 9
    %p316 = pnand %p314, %p315
    %p317 = pneg %p316
    // Predicated region
    $region9: #{transformer_encoder.5} parent=5 // pred_check
      _
    $region10: #{transformer_encoder.5} parent=5 // pred_check_branch
      %319 = sbr.rel (%p316) target = $region12
    $region11: #{transformer_encoder.5} parent=5 // pred_region
      %s320 = ssub.s32 %s18, 1
      // Predicated region
      $region13: #{transformer_encoder.5} parent=11 // pred_check
        %p321 = pneg %p91
      $region14: #{transformer_encoder.5} parent=11 // pred_check_branch
        %323 = sbr.rel (%p321) target = $region16
      $region15: #{transformer_encoder.5} parent=11 // pred_region
        _
      $region16: #{transformer_encoder.5} parent=11 // pred_fallthru
        _
      // Predicated region
      $region17: #{transformer_encoder.5} parent=11 // pred_check
        %p324 = pneg %p112
      $region18: #{transformer_encoder.5} parent=11 // pred_check_branch
        %326 = sbr.rel (%p324) target = $region20
      $region19: #{transformer_encoder.5} parent=11 // pred_region
        _
      $region20: #{transformer_encoder.5} parent=11 // pred_fallthru
        _
      // Predicated region
      $region21: #{transformer_encoder.5} parent=11 // pred_check
        %p327 = pneg %p133
      $region22: #{transformer_encoder.5} parent=11 // pred_check_branch
        %329 = sbr.rel (%p327) target = $region24
      $region23: #{transformer_encoder.5} parent=11 // pred_region
        _
      $region24: #{transformer_encoder.5} parent=11 // pred_fallthru
        _
      // Predicated region
      $region25: #{transformer_encoder.5} parent=11 // pred_check
        %p330 = pneg %p154
      $region26: #{transformer_encoder.5} parent=11 // pred_check_branch
        %332 = sbr.rel (%p330) target = $region28
      $region27: #{transformer_encoder.5} parent=11 // pred_region
        _
      $region28: #{transformer_encoder.5} parent=11 // pred_fallthru
        _
      // Predicated region
      $region29: #{transformer_encoder.5} parent=11 // pred_check
        %p333 = pneg %p175
      $region30: #{transformer_encoder.5} parent=11 // pred_check_branch
        %335 = sbr.rel (%p333) target = $region32
      $region31: #{transformer_encoder.5} parent=11 // pred_region
        _
      $region32: #{transformer_encoder.5} parent=11 // pred_fallthru
        _
      // Predicated region
      $region33: #{transformer_encoder.5} parent=11 // pred_check
        %p336 = pneg %p196
      $region34: #{transformer_encoder.5} parent=11 // pred_check_branch
        %338 = sbr.rel (%p336) target = $region36
      $region35: #{transformer_encoder.5} parent=11 // pred_region
        _
      $region36: #{transformer_encoder.5} parent=11 // pred_fallthru
        _
      // Predicated region
      $region37: #{transformer_encoder.5} parent=11 // pred_check
        %p339 = pneg %p217
      $region38: #{transformer_encoder.5} parent=11 // pred_check_branch
        %341 = sbr.rel (%p339) target = $region40
      $region39: #{transformer_encoder.5} parent=11 // pred_region
        _
      $region40: #{transformer_encoder.5} parent=11 // pred_fallthru
        _
      // Predicated region
      $region41: #{transformer_encoder.5} parent=11 // pred_check
        %p342 = pneg %p238
      $region42: #{transformer_encoder.5} parent=11 // pred_check_branch
        %344 = sbr.rel (%p342) target = $region44
      $region43: #{transformer_encoder.5} parent=11 // pred_region
        _
      $region44: #{transformer_encoder.5} parent=11 // pred_fallthru
        _
      // Predicated region
      $region45: #{transformer_encoder.5} parent=11 // pred_check
        %p345 = pneg %p259
      $region46: #{transformer_encoder.5} parent=11 // pred_check_branch
        %347 = sbr.rel (%p345) target = $region48
      $region47: #{transformer_encoder.5} parent=11 // pred_region
        _
      $region48: #{transformer_encoder.5} parent=11 // pred_fallthru
        _
      // Predicated region
      $region49: #{transformer_encoder.5} parent=11 // pred_check
        %p348 = pneg %p280
      $region50: #{transformer_encoder.5} parent=11 // pred_check_branch
        %350 = sbr.rel (%p348) target = $region52
      $region51: #{transformer_encoder.5} parent=11 // pred_region
        _
      $region52: #{transformer_encoder.5} parent=11 // pred_fallthru
        _
    $region12: #{transformer_encoder.5} parent=5 // pred_fallthru
      _
    %p351 = scmp.lt.s32.totalorder %s18, 8
    // Predicated region
    $region53: #{transformer_encoder.5} parent=5 // pred_check
      %p352 = pneg %p351
    $region54: #{transformer_encoder.5} parent=5 // pred_check_branch
      %354 = sbr.rel (%p352) target = $region56
    $region55: #{transformer_encoder.5} parent=5 // pred_region
      // Predicated region
      $region57: #{transformer_encoder.5} parent=55 // pred_check
        %p355 = pneg %p38
      $region58: #{transformer_encoder.5} parent=55 // pred_check_branch
        %357 = sbr.rel (%p355) target = $region60
      $region59: #{transformer_encoder.5} parent=55 // pred_region
        %p358 = scmp.lt.s32.totalorder %s18, 7
        %s359 = scalar_select %p358, %s18, 7
        %s360 = smul.addr %s359, 4
        %s361 = scalar_lea.vmem %s0, %s360
      $region60: #{transformer_encoder.5} parent=55 // pred_fallthru
        _
      // Predicated region
      $region61: #{transformer_encoder.5} parent=55 // pred_check
        %p362 = pneg %p64
      $region62: #{transformer_encoder.5} parent=55 // pred_check_branch
        %364 = sbr.rel (%p362) target = $region64
      $region63: #{transformer_encoder.5} parent=55 // pred_region
        %p365 = scmp.lt.s32.totalorder %s18, 7
        %s366 = scalar_select %p365, %s18, 7
        %s367 = scalar_lea.vmem %s1, %s366
      $region64: #{transformer_encoder.5} parent=55 // pred_fallthru
        _
    $region56: #{transformer_encoder.5} parent=5 // pred_fallthru
      _
    %p368 = scmp.le.s32.totalorder 1, %s18
    %p369 = scmp.lt.s32.totalorder %s18, 9
    %p370 = pnand %p368, %p369
    %p371 = pneg %p370
    // Predicated region
    $region65: #{transformer_encoder.5} parent=5 // pred_check
      _
    $region66: #{transformer_encoder.5} parent=5 // pred_check_branch
      %373 = sbr.rel (%p370) target = $region68
    $region67: #{transformer_encoder.5} parent=5 // pred_region
      %s374 = ssub.s32 %s18, 1
      %p375 = scmp.lt.s32.totalorder %s23, 7
      %s376 = scalar_select %p375, %s23, 7
      %s377 = smul.addr %s376, 4
      %s378 = scalar_lea.vmem %s0, %s377
      %p379 = pneg %p44
      %p380 = pneg %p41
      %p381 = scmp.lt.s32.totalorder %s23, 7
      %s382 = scalar_select %p381, %s23, 7
      %s383 = scalar_lea.vmem %s1, %s382
      %p384 = pneg %p70
      %p385 = pneg %p67
      %p386 = pneg %p91
      %p387 = pneg %p88
      %p388 = pneg %p112
      %p389 = pneg %p109
      %p390 = pneg %p133
      %p391 = pneg %p130
      %p392 = pneg %p154
      %p393 = pneg %p151
      %p394 = pneg %p175
      %p395 = pneg %p172
      %p396 = pneg %p196
      %p397 = pneg %p193
      %p398 = pneg %p217
      %p399 = pneg %p214
      %p400 = pneg %p238
      %p401 = pneg %p235
      %p402 = pneg %p259
      %p403 = pneg %p256
      %p404 = pneg %p280
      %p405 = pneg %p277
      %p406 = pneg %p306
      %p407 = pneg %p303
      %p408 = scmp.lt.s32.totalorder %s23, 7
      %s409 = scalar_select %p408, %s23, 7
      %s410 = smul.addr %s409, 4
      %s411 = scalar_lea.vmem %s12, %s410
      %p412 = scmp.lt.s32.totalorder %s23, 7
      %s413 = scalar_select %p412, %s23, 7
      %s414 = smul.addr %s413, 4
      %s415 = scalar_lea.vmem %s0, %s414
      %p416 = scmp.lt.s32.totalorder %s23, 7
      %s417 = scalar_select %p416, %s23, 7
      %s418 = scalar_lea.vmem %s1, %s417
      %p419 = scmp.lt.s32.totalorder %s23, 7
      %s420 = scalar_select %p419, %s23, 7
      %s421 = smul.addr %s420, 4
      %s422 = scalar_lea.vmem %s12, %s421
      %v424 = vld [vmem:[%s415] sm:$0xf]
      %v425 = vld [vmem:[%s418] sm:$0x1]
      %v426 = vld [vmem:[%s9] sm:$0x1]
      %v427 = vunpack.c.l.bf16 %v424
      %v429 = vperm.slane %v426, 0
      %v431 = vadd.f32 %v429, %v427
      %v432 = vld [vmem:[%s2] sm:$0xf]
      %v433 = vld [vmem:[%s2 + $0x4] sm:$0xf]
      %v434 = vld [vmem:[%s2 + $0x8] sm:$0xf]
      %v435 = vld [vmem:[%s2 + $0xc] sm:$0xf]
      %v436 = vld [vmem:[%s5] sm:$0x1]
      %v438 = vperm.slane %v436, 0
      %v444 = vunpack.c.l.b16 %v432
      %v445 = vunpack.c.l.b16 %v433
      %v446 = vunpack.c.l.b16 %v434
      %v447 = vunpack.c.l.b16 %v435
      %v448 = vpack.c.b16 %v445, %v444
      %v449 = vpack.c.b16 %v447, %v446
      %vm452 = vcmask 261120
      %v454 = vsel %vm452, %v424, 0
      %456 = vmatpush.bf16.msra.mxu0 0
      %457 = vmatpush.bf16.msra.mxu0 0
      %458 = vmatpush.bf16.msra.mxu0 0
      %459 = vmatpush.bf16.msra.mxu0 0
      %460 = vmatpush.bf16.msra.mxu0 0
      %461 = vmatpush.bf16.msra.mxu0 0
      %462 = vmatpush.bf16.msra.mxu0 %v449
      %463 = vmatpush.bf16.msra.mxu0 %v448
      %464 = vmatmul.bf16.gmra.mxu0 %v454
      %v465 = vpop.f32.mrf.mxu0
      %v466 = vadd.f32 %v438, %v465
      %v467 = vpop.f32.mrf.mxu0
      %468 = vdwg.mxu0
      %v469 = vld [vmem:[%s3] sm:$0xf]
      %v470 = vld [vmem:[%s3 + $0x4] sm:$0xf]
      %v471 = vld [vmem:[%s3 + $0x8] sm:$0xf]
      %v472 = vld [vmem:[%s3 + $0xc] sm:$0xf]
      %v473 = vld [vmem:[%s6] sm:$0x1]
      %v475 = vperm.slane %v473, 0
      %v481 = vunpack.c.l.b16 %v469
      %v482 = vunpack.c.l.b16 %v470
      %v483 = vunpack.c.l.b16 %v471
      %v484 = vunpack.c.l.b16 %v472
      %v485 = vpack.c.b16 %v482, %v481
      %v486 = vpack.c.b16 %v484, %v483
      %489 = vmatpush.bf16.msra.mxu0 0
      %490 = vmatpush.bf16.msra.mxu0 0
      %491 = vmatpush.bf16.msra.mxu0 0
      %492 = vmatpush.bf16.msra.mxu0 0
      %493 = vmatpush.bf16.msra.mxu0 0
      %494 = vmatpush.bf16.msra.mxu0 0
      %495 = vmatpush.bf16.msra.mxu0 %v486
      %496 = vmatpush.bf16.msra.mxu0 %v485
      %497 = vmatmul.bf16.gmra.mxu0 %v454
      %v498 = vpop.f32.mrf.mxu0
      %v499 = vadd.f32 %v475, %v498
      %v500 = vpop.f32.mrf.mxu0
      %501 = vdwg.mxu0
      %v502 = vld [vmem:[%s4] sm:$0xf]
      %v503 = vld [vmem:[%s4 + $0x4] sm:$0xf]
      %v504 = vld [vmem:[%s4 + $0x8] sm:$0xf]
      %v505 = vld [vmem:[%s4 + $0xc] sm:$0xf]
      %v506 = vld [vmem:[%s7] sm:$0x1]
      %v508 = vperm.slane %v506, 0
      %v514 = vunpack.c.l.b16 %v502
      %v515 = vunpack.c.l.b16 %v503
      %v516 = vunpack.c.l.b16 %v504
      %v517 = vunpack.c.l.b16 %v505
      %v518 = vpack.c.b16 %v515, %v514
      %v519 = vpack.c.b16 %v517, %v516
      %522 = vmatpush.bf16.msra.mxu0 0
      %523 = vmatpush.bf16.msra.mxu0 0
      %524 = vmatpush.bf16.msra.mxu0 0
      %525 = vmatpush.bf16.msra.mxu0 0
      %526 = vmatpush.bf16.msra.mxu0 0
      %527 = vmatpush.bf16.msra.mxu0 0
      %528 = vmatpush.bf16.msra.mxu0 %v519
      %529 = vmatpush.bf16.msra.mxu0 %v518
      %530 = vmatmul.bf16.gmra.mxu0 %v454
      %v531 = vpop.f32.mrf.mxu0
      %v532 = vadd.f32 %v508, %v531
      %v533 = vpop.f32.mrf.mxu0
      %534 = vdwg.mxu0
      %v535 = vpack.c.bf16 %v466, %v466
      %v536 = vpack.c.bf16 %v499, %v499
      %vm537 = vcmask 130048
      %v539 = vsel %vm537, %v535, 0
      %v542 = vsel %vm537, %v536, 0
      %544 = vmatpush.bf16.xpose.msra.mxu0 0
      %545 = vmatpush.bf16.xpose.msra.mxu0 0
      %546 = vmatpush.bf16.xpose.msra.mxu0 0
      %547 = vmatpush.bf16.xpose.msra.mxu0 0
      %548 = vmatpush.bf16.xpose.msra.mxu0 0
      %549 = vmatpush.bf16.xpose.msra.mxu0 0
      %550 = vmatpush.bf16.xpose.msra.mxu0 0
      %551 = vmatpush.bf16.xpose.msra.mxu0 %v542
      %552 = vmatmul.bf16.gmra.mxu0 %v539
      %v553 = vpop.f32.mrf.mxu0
      %v554 = vadd.f32 0.0, %v553
      %v555 = vpop.f32.mrf.mxu0
      %556 = vdwg.mxu0
      %v557 = vmul.f32 %v554, 0.25
      %vm558 = vcmp.gt.f32.partialorder %v425, 0.0
      %v559 = vsel %vm558, 1, 0
      %v560 = vperm.slane %v559, 0
      %vm561 = vcmp.eq.s32.totalorder %v560, 1
      %v562 = vsel %vm561, %v557, -1e+30
      %vm563 = vcmask 64512
      %v564 = vsel %vm563, %v562, -inf
      %565 = vmax.xlane.f32.xlu0 %v564
      %v566 = vpop.xlane.xlu0 %565
      %v567 = vsub.f32 %v562, %v566
      %v568 = vmul.f32 %v567, 1.442695
      %v569 = vpow.pop %v568
      %v570 = vsel %vm563, %v569, 0.0
      %571 = vadd.xlane.f32.xlu0 %v570
      %v572 = vpop.xlane.xlu0 %571
      %v573 = vrcp.pop %v572
      %v574 = vmul.f32 %v569, %v573
      %v575 = vpack.c.bf16 %v574, %v574
      %v576 = vpack.c.bf16 %v532, %v532
      %v578 = vsel %vm563, %v575, 0
      %vm580 = vcmask 1043456
      %v582 = vsel %vm580, %v576, 0
      %584 = vmatpush.bf16.msra.mxu0 0
      %585 = vmatpush.bf16.msra.mxu0 0
      %586 = vmatpush.bf16.msra.mxu0 0
      %587 = vmatpush.bf16.msra.mxu0 0
      %588 = vmatpush.bf16.msra.mxu0 0
      %589 = vmatpush.bf16.msra.mxu0 0
      %590 = vmatpush.bf16.msra.mxu0 0
      %591 = vmatpush.bf16.msra.mxu0 %v582
      %592 = vmatmul.bf16.gmra.mxu0 %v578
      %v593 = vpop.f32.mrf.mxu0
      %v594 = vadd.f32 0.0, %v593
      %v595 = vpop.f32.mrf.mxu0
      %596 = vdwg.mxu0
      %v597 = vpack.c.bf16 %v594, %v594
      %v598 = vld [vmem:[%s8] sm:$0xf]
      %v599 = vld [vmem:[%s8 + $0x4] sm:$0xf]
      %v602 = vunpack.c.l.b16 %v598
      %v603 = vunpack.c.l.b16 %v599
      %v604 = vpack.c.b16 %v603, %v602
      %v607 = vsel %vm537, %v597, 0
      %609 = vmatpush.bf16.msra.mxu0 0
      %610 = vmatpush.bf16.msra.mxu0 0
      %611 = vmatpush.bf16.msra.mxu0 0
      %612 = vmatpush.bf16.msra.mxu0 0
      %613 = vmatpush.bf16.msra.mxu0 0
      %614 = vmatpush.bf16.msra.mxu0 0
      %615 = vmatpush.bf16.msra.mxu0 0
      %616 = vmatpush.bf16.msra.mxu0 %v604
      %617 = vmatmul.bf16.gmra.mxu0 %v607
      %v618 = vpop.f32.mrf.mxu0
      %v619 = vadd.f32 0.0, %v618
      %v620 = vpop.f32.mrf.mxu0
      %621 = vdwg.mxu0
      %v622 = vadd.f32 %v431, %v619
      %s623 = scalar_lea.vmem %s2, 16
      %v624 = vld [vmem:[%s623] sm:$0xf]
      %v625 = vld [vmem:[%s623 + $0x4] sm:$0xf]
      %v626 = vld [vmem:[%s623 + $0x8] sm:$0xf]
      %v627 = vld [vmem:[%s623 + $0xc] sm:$0xf]
      %s628 = scalar_lea.vmem %s5, 1
      %v629 = vld [vmem:[%s628] sm:$0x1]
      %v631 = vperm.slane %v629, 0
      %v637 = vunpack.c.l.b16 %v624
      %v638 = vunpack.c.l.b16 %v625
      %v639 = vunpack.c.l.b16 %v626
      %v640 = vunpack.c.l.b16 %v627
      %v641 = vpack.c.b16 %v638, %v637
      %v642 = vpack.c.b16 %v640, %v639
      %645 = vmatpush.bf16.msra.mxu0 0
      %646 = vmatpush.bf16.msra.mxu0 0
      %647 = vmatpush.bf16.msra.mxu0 0
      %648 = vmatpush.bf16.msra.mxu0 0
      %649 = vmatpush.bf16.msra.mxu0 0
      %650 = vmatpush.bf16.msra.mxu0 0
      %651 = vmatpush.bf16.msra.mxu0 %v642
      %652 = vmatpush.bf16.msra.mxu0 %v641
      %653 = vmatmul.bf16.gmra.mxu0 %v454
      %v654 = vpop.f32.mrf.mxu0
      %v655 = vadd.f32 %v631, %v654
      %v656 = vpop.f32.mrf.mxu0
      %657 = vdwg.mxu0
      %s658 = scalar_lea.vmem %s3, 16
      %v659 = vld [vmem:[%s658] sm:$0xf]
      %v660 = vld [vmem:[%s658 + $0x4] sm:$0xf]
      %v661 = vld [vmem:[%s658 + $0x8] sm:$0xf]
      %v662 = vld [vmem:[%s658 + $0xc] sm:$0xf]
      %s663 = scalar_lea.vmem %s6, 1
      %v664 = vld [vmem:[%s663] sm:$0x1]
      %v666 = vperm.slane %v664, 0
      %v672 = vunpack.c.l.b16 %v659
      %v673 = vunpack.c.l.b16 %v660
      %v674 = vunpack.c.l.b16 %v661
      %v675 = vunpack.c.l.b16 %v662
      %v676 = vpack.c.b16 %v673, %v672
      %v677 = vpack.c.b16 %v675, %v674
      %680 = vmatpush.bf16.msra.mxu0 0
      %681 = vmatpush.bf16.msra.mxu0 0
      %682 = vmatpush.bf16.msra.mxu0 0
      %683 = vmatpush.bf16.msra.mxu0 0
      %684 = vmatpush.bf16.msra.mxu0 0
      %685 = vmatpush.bf16.msra.mxu0 0
      %686 = vmatpush.bf16.msra.mxu0 %v677
      %687 = vmatpush.bf16.msra.mxu0 %v676
      %688 = vmatmul.bf16.gmra.mxu0 %v454
      %v689 = vpop.f32.mrf.mxu0
      %v690 = vadd.f32 %v666, %v689
      %v691 = vpop.f32.mrf.mxu0
      %692 = vdwg.mxu0
      %s693 = scalar_lea.vmem %s4, 16
      %v694 = vld [vmem:[%s693] sm:$0xf]
      %v695 = vld [vmem:[%s693 + $0x4] sm:$0xf]
      %v696 = vld [vmem:[%s693 + $0x8] sm:$0xf]
      %v697 = vld [vmem:[%s693 + $0xc] sm:$0xf]
      %s698 = scalar_lea.vmem %s7, 1
      %v699 = vld [vmem:[%s698] sm:$0x1]
      %v701 = vperm.slane %v699, 0
      %v707 = vunpack.c.l.b16 %v694
      %v708 = vunpack.c.l.b16 %v695
      %v709 = vunpack.c.l.b16 %v696
      %v710 = vunpack.c.l.b16 %v697
      %v711 = vpack.c.b16 %v708, %v707
      %v712 = vpack.c.b16 %v710, %v709
      %715 = vmatpush.bf16.msra.mxu0 0
      %716 = vmatpush.bf16.msra.mxu0 0
      %717 = vmatpush.bf16.msra.mxu0 0
      %718 = vmatpush.bf16.msra.mxu0 0
      %719 = vmatpush.bf16.msra.mxu0 0
      %720 = vmatpush.bf16.msra.mxu0 0
      %721 = vmatpush.bf16.msra.mxu0 %v712
      %722 = vmatpush.bf16.msra.mxu0 %v711
      %723 = vmatmul.bf16.gmra.mxu0 %v454
      %v724 = vpop.f32.mrf.mxu0
      %v725 = vadd.f32 %v701, %v724
      %v726 = vpop.f32.mrf.mxu0
      %727 = vdwg.mxu0
      %v728 = vpack.c.bf16 %v655, %v655
      %v729 = vpack.c.bf16 %v690, %v690
      %v731 = vsel %vm537, %v728, 0
      %v734 = vsel %vm537, %v729, 0
      %736 = vmatpush.bf16.xpose.msra.mxu0 0
      %737 = vmatpush.bf16.xpose.msra.mxu0 0
      %738 = vmatpush.bf16.xpose.msra.mxu0 0
      %739 = vmatpush.bf16.xpose.msra.mxu0 0
      %740 = vmatpush.bf16.xpose.msra.mxu0 0
      %741 = vmatpush.bf16.xpose.msra.mxu0 0
      %742 = vmatpush.bf16.xpose.msra.mxu0 0
      %743 = vmatpush.bf16.xpose.msra.mxu0 %v734
      %744 = vmatmul.bf16.gmra.mxu0 %v731
      %v745 = vpop.f32.mrf.mxu0
      %v746 = vadd.f32 0.0, %v745
      %v747 = vpop.f32.mrf.mxu0
      %748 = vdwg.mxu0
      %v749 = vmul.f32 %v746, 0.25
      %v750 = vsel %vm561, %v749, -1e+30
      %v751 = vsel %vm563, %v750, -inf
      %752 = vmax.xlane.f32.xlu0 %v751
      %v753 = vpop.xlane.xlu0 %752
      %v754 = vsub.f32 %v750, %v753
      %v755 = vmul.f32 %v754, 1.442695
      %v756 = vpow.pop %v755
      %v757 = vsel %vm563, %v756, 0.0
      %758 = vadd.xlane.f32.xlu0 %v757
      %v759 = vpop.xlane.xlu0 %758
      %v760 = vrcp.pop %v759
      %v761 = vmul.f32 %v756, %v760
      %v762 = vpack.c.bf16 %v761, %v761
      %v763 = vpack.c.bf16 %v725, %v725
      %v765 = vsel %vm563, %v762, 0
      %v768 = vsel %vm580, %v763, 0
      %770 = vmatpush.bf16.msra.mxu0 0
      %771 = vmatpush.bf16.msra.mxu0 0
      %772 = vmatpush.bf16.msra.mxu0 0
      %773 = vmatpush.bf16.msra.mxu0 0
      %774 = vmatpush.bf16.msra.mxu0 0
      %775 = vmatpush.bf16.msra.mxu0 0
      %776 = vmatpush.bf16.msra.mxu0 0
      %777 = vmatpush.bf16.msra.mxu0 %v768
      %778 = vmatmul.bf16.gmra.mxu0 %v765
      %v779 = vpop.f32.mrf.mxu0
      %v780 = vadd.f32 0.0, %v779
      %v781 = vpop.f32.mrf.mxu0
      %782 = vdwg.mxu0
      %v783 = vpack.c.bf16 %v780, %v780
      %s784 = scalar_lea.vmem %s8, 8
      %v785 = vld [vmem:[%s784] sm:$0xf]
      %v786 = vld [vmem:[%s784 + $0x4] sm:$0xf]
      %v789 = vunpack.c.l.b16 %v785
      %v790 = vunpack.c.l.b16 %v786
      %v791 = vpack.c.b16 %v790, %v789
      %v794 = vsel %vm537, %v783, 0
      %796 = vmatpush.bf16.msra.mxu0 0
      %797 = vmatpush.bf16.msra.mxu0 0
      %798 = vmatpush.bf16.msra.mxu0 0
      %799 = vmatpush.bf16.msra.mxu0 0
      %800 = vmatpush.bf16.msra.mxu0 0
      %801 = vmatpush.bf16.msra.mxu0 0
      %802 = vmatpush.bf16.msra.mxu0 0
      %803 = vmatpush.bf16.msra.mxu0 %v791
      %804 = vmatmul.bf16.gmra.mxu0 %v794
      %v805 = vpop.f32.mrf.mxu0
      %v806 = vadd.f32 0.0, %v805
      %v807 = vpop.f32.mrf.mxu0
      %808 = vdwg.mxu0
      %v809 = vadd.f32 %v622, %v806
      %v810 = vld [vmem:[%s10] sm:$0x1]
      %v811 = vld [vmem:[%s11] sm:$0x1]
      %v812 = vsel %vm452, %v809, 0.0
      %813 = vadd.xlane.f32.xlu0 %v812
      %v814 = vpop.xlane.xlu0 %813
      %v815 = vrcp.pop 32.0
      %v816 = vmul.f32 32.0, %v815
      %v817 = vsub.f32 1.0, %v816
      %v818 = vmul.f32 %v815, %v817
      %v819 = vadd.f32 %v815, %v818
      %vm820 = vweird.f32 %v815
      %v821 = vsel %vm820, %v815, %v819
      %v822 = vmul.f32 %v814, %v821
      %v823 = vsub.f32 %v809, %v822
      %v824 = vmul.f32 %v823, %v823
      %v825 = vsel %vm452, %v824, 0.0
      %826 = vadd.xlane.f32.xlu0 %v825
      %v827 = vpop.xlane.xlu0 %826
      %v828 = vmul.f32 %v827, %v821
      %v829 = vadd.f32 %v828, 1e-05
      %v830 = vrsqrt.pop %v829
      %v831 = vmul.f32 %v830, %v829
      %v832 = vmul.f32 %v831, %v830
      %v833 = vmul.f32 0.5, %v832
      %v834 = vsub.f32 1.5, %v833
      %v835 = vmul.f32 %v830, %v834
      %vm836 = vweird.f32 %v829
      %vm837 = vweird.f32 %v830
      %vm838 = vmor %vm836, %vm837
      %v839 = vsel %vm838, %v830, %v835
      %v840 = vmul.f32 %v823, %v839
      %v842 = vperm.slane %v810, 0
      %v844 = vmul.f32 %v840, %v842
      %v846 = vperm.slane %v811, 0
      %v848 = vadd.f32 %v844, %v846
      %v849 = vpack.c.bf16 %v848, %v848
      %vm850 = vcmask 257024
      %851 = vst.msk [vmem:[%s422] sm:$0xf] %vm850, %v849
      %p852 = scmp.lt.s32.totalorder %s23, 7
      %s853 = scalar_select %p852, %s23, 7
      %s854 = smul.addr %s853, 4
      %s855 = scalar_lea.vmem %s12, %s854
      // Predicated region
      $region69: #{transformer_encoder.5} parent=67 // pred_check
        %p856 = pneg %p303
      $region70: #{transformer_encoder.5} parent=67 // pred_check_branch
        %858 = sbr.rel (%p856) target = $region72
      $region71: #{transformer_encoder.5} parent=67 // pred_region
        _
      $region72: #{transformer_encoder.5} parent=67 // pred_fallthru
        _
    $region68: #{transformer_encoder.5} parent=5 // pred_fallthru
      _
    %p859 = scmp.le.s32.totalorder 2, %s18
    // Predicated region
    $region73: #{transformer_encoder.5} parent=5 // pred_check
      %p860 = pneg %p859
    $region74: #{transformer_encoder.5} parent=5 // pred_check_branch
      %862 = sbr.rel (%p860) target = $region76
    $region75: #{transformer_encoder.5} parent=5 // pred_region
      %s863 = ssub.s32 %s18, 2
      // Predicated region
      $region77: #{transformer_encoder.5} parent=75 // pred_check
        %p864 = pneg %p309
      $region78: #{transformer_encoder.5} parent=75 // pred_check_branch
        %866 = sbr.rel (%p864) target = $region80
      $region79: #{transformer_encoder.5} parent=75 // pred_region
        %p867 = scmp.lt.s32.totalorder %s24, 7
        %s868 = scalar_select %p867, %s24, 7
        %s869 = smul.addr %s868, 4
        %s870 = scalar_lea.vmem %s12, %s869
      $region80: #{transformer_encoder.5} parent=75 // pred_fallthru
        _
    $region76: #{transformer_encoder.5} parent=5 // pred_fallthru
      _
  $region6: #{transformer_encoder.5} parent=0 // loop_footer
    %s22 = sadd.s32 1, %s18
  $region7: #{transformer_encoder.5} parent=0 // loop_footer_branch
    %17 = sbr.rel target = $region3
  $region8: #{transformer_encoder.5} parent=0 // loop_exit
    _

</llo_original>
